<compile_context>
chip_gen: v7x
topology: tpu7x:2x2x1
jax: 0.10.0
libtpu: 0.0.40
codegen_flags: <defaults>
</compile_context>

<pallas_src>
import jax
import jax.numpy as jnp
from jax import lax
from jax.experimental import pallas as pl
from jax.experimental.pallas import tpu as pltpu

EPS = 1e-3  # BatchNorm2d eps=0.001


def _round_up(a, b):
    return (a + b - 1) // b * b


def _vmem_limit(nbytes):
    # actual need + headroom, capped below v7x's 64 MiB physical VMEM.
    return int(min(max(nbytes + (8 << 20), 16 << 20), 56 << 20))


# ---------------------------------------------------------------------------
# Pass 1: conv tile (MXU, bf16 x bf16 -> f32) written out as bf16, plus
# per-channel sum / sum-of-squares (from the f32 accumulator) accumulated into
# a resident (1, 8, Cp) partial-stat block per outer ("parallel") chunk.
# ---------------------------------------------------------------------------
def _conv_stats_kernel(p_ref, w_ref, conv_ref, sum_ref, sq_ref):
    i = pl.program_id(1)  # inner ("arbitrary") reduction axis

    conv = jnp.dot(p_ref[...], w_ref[...], preferred_element_type=jnp.float32)
    conv_ref[...] = conv.astype(jnp.bfloat16)

    @pl.when(i == 0)
    def _():
        sum_ref[...] = jnp.zeros_like(sum_ref)
        sq_ref[...] = jnp.zeros_like(sq_ref)

    tm, cp = conv.shape
    c3 = conv.reshape(tm // 8, 8, cp)          # sublane-grouped partial sums
    sum_ref[...] += jnp.sum(c3, axis=0)[None]
    sq_ref[...] += jnp.sum(c3 * c3, axis=0)[None]


# ---------------------------------------------------------------------------
# Pass 2: per-element FMA + ReLU with precomputed per-channel scale/shift.
# ---------------------------------------------------------------------------
def _bn_relu_kernel(conv_ref, scale_ref, shift_ref, o_ref):
    c = conv_ref[...].astype(jnp.float32)
    o_ref[...] = jnp.maximum(c * scale_ref[...] + shift_ref[...], 0.0)


def basic_conv2d(x, weight, gamma, beta, padding=0, tm=512):
    """x: [N, Cin, H, W] f32; weight: [Cout, Cin, KH, KW]; gamma/beta: [Cout]."""
    N, Cin, H, W = x.shape
    Cout, _, KH, KW = weight.shape
    if padding:
        x = jnp.pad(x, ((0, 0), (0, 0), (padding, padding), (padding, padding)))
        H += 2 * padding
        W += 2 * padding
    Ho, Wo = H - KH + 1, W - KW + 1

    M = N * Ho * Wo
    K = Cin * KH * KW
    Kp = _round_up(K, 128)
    Cp = _round_up(Cout, 128)

    # Row tile: multiple of 16 (bf16 sublane packing).
    TM = _round_up(min(tm, M), 16)

    def pass1_bytes(t):
        return (2 * t * Kp * 2      # double-buffered bf16 patches tile
                + Kp * Cp * 2       # bf16 weight, single resident buffer
                + 2 * t * Cp * 2    # double-buffered bf16 conv output tile
                + 2 * 2 * 8 * Cp * 4)  # two stat outputs

    while pass1_bytes(TM) > (48 << 20) and TM > 16:
        TM = max(16, (TM // 2 // 16) * 16)

    # Pad M so it splits into 2 parallel chunks of n_half tiles each
    # (outer "parallel" axis feeds v7x's two TensorCores; harmless elsewhere).
    Mp = _round_up(M, 2 * TM)
    n_half = Mp // (2 * TM)
    n_tiles = Mp // TM

    # ---- im2col (plain-JAX glue), cast to bf16 for the MXU ------------------
    cols = []
    for kh in range(KH):
        for kw in range(KW):
            cols.append(x[:, :, kh:kh + Ho, kw:kw + Wo])        # [N, Cin, Ho, Wo]
    patches = jnp.stack(cols, axis=2)                           # [N, Cin, KH*KW, Ho, Wo]
    patches = patches.transpose(0, 3, 4, 1, 2).reshape(M, K)    # k = c*KH*KW + kh*KW + kw
    wmat = weight.reshape(Cout, K).T                            # [K, Cout], same ordering

    patches_p = jnp.pad(patches.astype(jnp.bfloat16), ((0, Mp - M), (0, Kp - K)))
    w_p = jnp.pad(wmat.astype(jnp.bfloat16), ((0, Kp - K), (0, Cp - Cout)))

    # ---- pass 1: tiled conv + per-chunk partial batch statistics ------------
    vmem1 = _vmem_limit(pass1_bytes(TM))

    def run_pass1(weight_spec):
        return pl.pallas_call(
            _conv_stats_kernel,
            out_shape=(jax.ShapeDtypeStruct((Mp, Cp), jnp.bfloat16),
                       jax.ShapeDtypeStruct((2, 8, Cp), jnp.float32),
                       jax.ShapeDtypeStruct((2, 8, Cp), jnp.float32)),
            grid=(2, n_half),
            in_specs=[pl.BlockSpec((TM, Kp), lambda c, i, n=n_half: (c * n + i, 0)),
                      weight_spec],
            out_specs=(pl.BlockSpec((TM, Cp), lambda c, i, n=n_half: (c * n + i, 0)),
                       pl.BlockSpec((1, 8, Cp), lambda c, i: (c, 0, 0)),   # resident per chunk
                       pl.BlockSpec((1, 8, Cp), lambda c, i: (c, 0, 0))),
            compiler_params=pltpu.CompilerParams(
                dimension_semantics=("parallel", "arbitrary"),
                vmem_limit_bytes=vmem1),
        )(patches_p, w_p)

    try:
        # Constant index_map -> a single pipeline buffer suffices (saves Kp*Cp*2 B).
        conv_out, csum, csq = run_pass1(
            pl.BlockSpec((Kp, Cp), lambda c, i: (0, 0), pipeline_mode=pl.Buffered(1)))
    except Exception:
        conv_out, csum, csq = run_pass1(pl.BlockSpec((Kp, Cp), lambda c, i: (0, 0)))

    # ---- O(Cout) glue: reduce partials, fold BN(train) into scale/shift -----
    inv_m = jnp.float32(1.0 / M)        # true M: zero-padded rows contribute 0
    total_sum = jnp.sum(csum, axis=(0, 1))[None, :]   # (1, Cp)
    total_sq = jnp.sum(csq, axis=(0, 1))[None, :]
    mean = total_sum * inv_m
    var = jnp.maximum(total_sq * inv_m - mean * mean, 0.0)   # clamp one-pass cancellation
    gamma_p = jnp.pad(gamma.astype(jnp.float32)[None, :], ((0, 0), (0, Cp - Cout)))
    beta_p = jnp.pad(beta.astype(jnp.float32)[None, :], ((0, 0), (0, Cp - Cout)))
    scale = gamma_p * lax.rsqrt(var + EPS)
    shift = beta_p - mean * scale

    # ---- pass 2: normalize + ReLU over the bf16 conv buffer ------------------
    bytes2 = 2 * TM * Cp * 2 + 2 * TM * Cp * 4 + 2 * 2 * 2 * Cp * 4
    vmem2 = _vmem_limit(bytes2)

    out = pl.pallas_call(
        _bn_relu_kernel,
        out_shape=jax.ShapeDtypeStruct((Mp, Cp), jnp.float32),
        grid=(n_tiles,),
        in_specs=[pl.BlockSpec((TM, Cp), lambda i: (i, 0)),
                  pl.BlockSpec((1, Cp), lambda i: (0, 0)),
                  pl.BlockSpec((1, Cp), lambda i: (0, 0))],
        out_specs=pl.BlockSpec((TM, Cp), lambda i: (i, 0)),
        compiler_params=pltpu.CompilerParams(
            dimension_semantics=("parallel",),                  # megacore on v7x
            vmem_limit_bytes=vmem2),
    )(conv_out, scale, shift)

    # NHWC [M, Cp] is already the lane-dense layout the next conv would want;
    # the transpose below only exists to match PyTorch's NCHW output.
    y = out[:M, :Cout].reshape(N, Ho, Wo, Cout).transpose(0, 3, 1, 2)
    return y


def _reference(x, weight, gamma, beta, padding=0):
    conv = lax.conv_general_dilated(
        x, weight, window_strides=(1, 1),
        padding=[(padding, padding), (padding, padding)],
        dimension_numbers=("NCHW", "OIHW", "NCHW"))
    mean = jnp.mean(conv, axis=(0, 2, 3), keepdims=True)
    var = jnp.mean((conv - mean) ** 2, axis=(0, 2, 3), keepdims=True)
    xn = (conv - mean) * lax.rsqrt(var + EPS)
    y = xn * gamma[None, :, None, None] + beta[None, :, None, None]
    return jnp.maximum(y, 0.0)


if __name__ == "__main__":
    key = jax.random.PRNGKey(0)
    kx, kw = jax.random.split(key)

    N, Cin, H, W = 2, 4, 16, 16
    Cout, KH, KW = 8, 3, 3
    padding = 0

    x = jax.random.normal(kx, (N, Cin, H, W), dtype=jnp.float32)
    # deterministic parameter init (synthetic; BasicConv2d.__init__ only fixes shapes)
    weight = 0.1 * jax.random.normal(kw, (Cout, Cin, KH, KW), dtype=jnp.float32)
    gamma = jnp.linspace(0.5, 1.5, Cout, dtype=jnp.float32)   # bn.weight
    beta = jnp.linspace(-0.2, 0.2, Cout, dtype=jnp.float32)   # bn.bias

    # tm=128 so this small test (M = 2*14*14 = 392 -> Mp=512, grid (2, 2))
    # exercises the parallel-chunk split and cross-tile stats accumulation.
    out = basic_conv2d(x, weight, gamma, beta, padding=padding, tm=128)
    out = jax.block_until_ready(out)

    # Check vs. a reference fed the same bf16-quantized matmul operands (the
    # kernel intentionally uses bf16 MXU inputs + a bf16 conv intermediate
    # with f32 accumulation, so tolerances reflect bf16 rounding).
    xq = x.astype(jnp.bfloat16).astype(jnp.float32)
    wq = weight.astype(jnp.bfloat16).astype(jnp.float32)
    ref_q = _reference(xq, wq, gamma, beta, padding=padding)
    # Looser sanity check vs. the pure-f32 reference.
    ref_f = _reference(x, weight, gamma, beta, padding=padding)

    assert out.shape == ref_f.shape, (out.shape, ref_f.shape)
    assert jnp.allclose(out, ref_q, atol=3e-2, rtol=2e-2), \
        float(jnp.max(jnp.abs(out - ref_q)))
    assert jnp.allclose(out, ref_f, atol=8e-2, rtol=5e-2), \
        float(jnp.max(jnp.abs(out - ref_f)))

    print("KERNEL_OK")
</pallas_src>

<mosaic_0001>
module attributes {stable_mosaic.version = 11 : i64} {
  func.func @_conv_stats_kernel(%arg0: i32, %arg1: i32, %arg2: memref<128x128xbf16, #tpu.memory_space<vmem>>, %arg3: memref<128x128xbf16, #tpu.memory_space<vmem>>, %arg4: memref<128x128xbf16, #tpu.memory_space<vmem>>, %arg5: memref<1x8x128xf32, #tpu.memory_space<vmem>>, %arg6: memref<1x8x128xf32, #tpu.memory_space<vmem>>) attributes {dimension_semantics = [#tpu.dimension_semantics<parallel>, #tpu.dimension_semantics<arbitrary>], iteration_bounds = array<i64: 2, 2>, scalar_prefetch = 0 : i64, scratch_operands = 0 : i64, tpu.core_type = #tpu.core_type<tc>, window_params = [{transform_indices = @transform_0, window_bounds = array<i64: 128, 128>}, {pipeline_mode = #tpu.pipeline_mode<synchronous>, transform_indices = @transform_1, window_bounds = array<i64: 128, 128>}, {transform_indices = @transform_2, window_bounds = array<i64: 128, 128>}, {transform_indices = @transform_3, window_bounds = array<i64: 1, 8, 128>}, {transform_indices = @transform_4, window_bounds = array<i64: 1, 8, 128>}]} {
    %c0 = arith.constant 0 : index
    %c0_0 = arith.constant 0 : index
    %0 = vector.load %arg2[%c0, %c0_0] : memref<128x128xbf16, #tpu.memory_space<vmem>>, vector<128x128xbf16>
    %c0_1 = arith.constant 0 : index
    %c0_2 = arith.constant 0 : index
    %1 = vector.load %arg3[%c0_1, %c0_2] : memref<128x128xbf16, #tpu.memory_space<vmem>>, vector<128x128xbf16>
    %cst = arith.constant dense<0.000000e+00> : vector<128x128xf32>
    %2 = tpu.matmul %0, %1, %cst {dimension_numbers = #tpu.dot_dimension_numbers<[1], [0], [0], [1], [0, 0, 1, 1], [], []>} : vector<128x128xbf16>, vector<128x128xbf16>, vector<128x128xf32> -> vector<128x128xf32>
    %3 = arith.truncf %2 : vector<128x128xf32> to vector<128x128xbf16>
    %c0_3 = arith.constant 0 : index
    %c0_4 = arith.constant 0 : index
    %4 = vector.load %arg4[%c0_3, %c0_4] : memref<128x128xbf16, #tpu.memory_space<vmem>>, vector<128x128xbf16>
    tpu.vector_store %arg4[%c0_3, %c0_4], %3 {strides = array<i32>} : memref<128x128xbf16, #tpu.memory_space<vmem>>, vector<128x128xbf16>,
    %c0_i32 = arith.constant 0 : i32
    %5 = arith.cmpi eq, %arg1, %c0_i32 : i32
    %6 = arith.extui %5 : i1 to i32
    %c0_i32_5 = arith.constant 0 : i32
    %7 = arith.cmpi ne, %6, %c0_i32_5 : i32
    scf.if %7 {
      %cst_20 = arith.constant 0.000000e+00 : f32
      %20 = vector.broadcast %cst_20 : f32 to vector<1x8x128xf32>
      %c0_21 = arith.constant 0 : index
      %c0_22 = arith.constant 0 : index
      %c0_23 = arith.constant 0 : index
      %21 = vector.load %arg5[%c0_21, %c0_22, %c0_23] : memref<1x8x128xf32, #tpu.memory_space<vmem>>, vector<1x8x128xf32>
      tpu.vector_store %arg5[%c0_21, %c0_22, %c0_23], %20 {strides = array<i32>} : memref<1x8x128xf32, #tpu.memory_space<vmem>>, vector<1x8x128xf32>,
      %cst_24 = arith.constant 0.000000e+00 : f32
      %22 = vector.broadcast %cst_24 : f32 to vector<1x8x128xf32>
      %c0_25 = arith.constant 0 : index
      %c0_26 = arith.constant 0 : index
      %c0_27 = arith.constant 0 : index
      %23 = vector.load %arg6[%c0_25, %c0_26, %c0_27] : memref<1x8x128xf32, #tpu.memory_space<vmem>>, vector<1x8x128xf32>
      tpu.vector_store %arg6[%c0_25, %c0_26, %c0_27], %22 {strides = array<i32>} : memref<1x8x128xf32, #tpu.memory_space<vmem>>, vector<1x8x128xf32>,
    } else {
    }
    %8 = vector.shape_cast %2 : vector<128x128xf32> to vector<16x8x128xf32>
    %c0_6 = arith.constant 0 : index
    %c0_7 = arith.constant 0 : index
    %c0_8 = arith.constant 0 : index
    %9 = vector.load %arg5[%c0_6, %c0_7, %c0_8] : memref<1x8x128xf32, #tpu.memory_space<vmem>>, vector<1x8x128xf32>
    %cst_9 = arith.constant dense<0.000000e+00> : vector<8x128xf32>
    %10 = vector.multi_reduction <add>, %8, %cst_9 [0] : vector<16x8x128xf32> to vector<8x128xf32>
    %11 = vector.shape_cast %10 : vector<8x128xf32> to vector<1x8x128xf32>
    %12 = arith.addf %9, %11 : vector<1x8x128xf32>
    %c0_10 = arith.constant 0 : index
    %c0_11 = arith.constant 0 : index
    %c0_12 = arith.constant 0 : index
    %13 = vector.load %arg5[%c0_10, %c0_11, %c0_12] : memref<1x8x128xf32, #tpu.memory_space<vmem>>, vector<1x8x128xf32>
    tpu.vector_store %arg5[%c0_10, %c0_11, %c0_12], %12 {strides = array<i32>} : memref<1x8x128xf32, #tpu.memory_space<vmem>>, vector<1x8x128xf32>,
    %c0_13 = arith.constant 0 : index
    %c0_14 = arith.constant 0 : index
    %c0_15 = arith.constant 0 : index
    %14 = vector.load %arg6[%c0_13, %c0_14, %c0_15] : memref<1x8x128xf32, #tpu.memory_space<vmem>>, vector<1x8x128xf32>
    %15 = arith.mulf %8, %8 : vector<16x8x128xf32>
    %cst_16 = arith.constant dense<0.000000e+00> : vector<8x128xf32>
    %16 = vector.multi_reduction <add>, %15, %cst_16 [0] : vector<16x8x128xf32> to vector<8x128xf32>
    %17 = vector.shape_cast %16 : vector<8x128xf32> to vector<1x8x128xf32>
    %18 = arith.addf %14, %17 : vector<1x8x128xf32>
    %c0_17 = arith.constant 0 : index
    %c0_18 = arith.constant 0 : index
    %c0_19 = arith.constant 0 : index
    %19 = vector.load %arg6[%c0_17, %c0_18, %c0_19] : memref<1x8x128xf32, #tpu.memory_space<vmem>>, vector<1x8x128xf32>
    tpu.vector_store %arg6[%c0_17, %c0_18, %c0_19], %18 {strides = array<i32>} : memref<1x8x128xf32, #tpu.memory_space<vmem>>, vector<1x8x128xf32>,
    return
  }
  func.func @transform_0(%arg0: i32, %arg1: i32) -> (i32, i32) {
    %c2_i32 = arith.constant 2 : i32
    %0 = arith.muli %arg0, %c2_i32 : i32
    %1 = arith.addi %0, %arg1 : i32
    %c0_i32 = arith.constant 0 : i32
    %c0_i32_0 = arith.constant 0 : i32
    return %1, %c0_i32 : i32, i32
  }
  func.func @transform_1(%arg0: i32, %arg1: i32) -> (i32, i32) {
    %c0_i32 = arith.constant 0 : i32
    %c0_i32_0 = arith.constant 0 : i32
    %c0_i32_1 = arith.constant 0 : i32
    return %c0_i32, %c0_i32_0 : i32, i32
  }
  func.func @transform_2(%arg0: i32, %arg1: i32) -> (i32, i32) {
    %c2_i32 = arith.constant 2 : i32
    %0 = arith.muli %arg0, %c2_i32 : i32
    %1 = arith.addi %0, %arg1 : i32
    %c0_i32 = arith.constant 0 : i32
    %c0_i32_0 = arith.constant 0 : i32
    return %1, %c0_i32 : i32, i32
  }
  func.func @transform_3(%arg0: i32, %arg1: i32) -> (i32, i32, i32) {
    %c0_i32 = arith.constant 0 : i32
    %c0_i32_0 = arith.constant 0 : i32
    %c0_i32_1 = arith.constant 0 : i32
    return %arg0, %c0_i32, %c0_i32_0 : i32, i32, i32
  }
  func.func @transform_4(%arg0: i32, %arg1: i32) -> (i32, i32, i32) {
    %c0_i32 = arith.constant 0 : i32
    %c0_i32_0 = arith.constant 0 : i32
    %c0_i32_1 = arith.constant 0 : i32
    return %arg0, %c0_i32, %c0_i32_0 : i32, i32, i32
  }
}

module attributes {stable_mosaic.version = 11 : i64} {
  func.func @_conv_stats_kernel(%arg0: i32, %arg1: i32, %arg2: memref<128x128xbf16, #tpu.memory_space<vmem>>, %arg3: memref<128x128xbf16, #tpu.memory_space<vmem>>, %arg4: memref<128x128xbf16, #tpu.memory_space<vmem>>, %arg5: memref<1x8x128xf32, #tpu.memory_space<vmem>>, %arg6: memref<1x8x128xf32, #tpu.memory_space<vmem>>) attributes {dimension_semantics = [#tpu.dimension_semantics<parallel>, #tpu.dimension_semantics<arbitrary>], iteration_bounds = array<i64: 2, 2>, scalar_prefetch = 0 : i64, scratch_operands = 0 : i64, tpu.core_type = #tpu.core_type<tc>, window_params = [{transform_indices = @transform_0, window_bounds = array<i64: 128, 128>}, {pipeline_mode = #tpu.pipeline_mode<synchronous>, transform_indices = @transform_1, window_bounds = array<i64: 128, 128>}, {transform_indices = @transform_2, window_bounds = array<i64: 128, 128>}, {transform_indices = @transform_3, window_bounds = array<i64: 1, 8, 128>}, {transform_indices = @transform_4, window_bounds = array<i64: 1, 8, 128>}]} {
    %c0 = arith.constant 0 : index
    %c0_0 = arith.constant 0 : index
    %0 = vector.load %arg2[%c0, %c0_0] : memref<128x128xbf16, #tpu.memory_space<vmem>>, vector<128x128xbf16>
    %c0_1 = arith.constant 0 : index
    %c0_2 = arith.constant 0 : index
    %1 = vector.load %arg3[%c0_1, %c0_2] : memref<128x128xbf16, #tpu.memory_space<vmem>>, vector<128x128xbf16>
    %cst = arith.constant dense<0.000000e+00> : vector<128x128xf32>
    %2 = tpu.matmul %0, %1, %cst {dimension_numbers = #tpu.dot_dimension_numbers<[1], [0], [0], [1], [0, 0, 1, 1], [], []>} : vector<128x128xbf16>, vector<128x128xbf16>, vector<128x128xf32> -> vector<128x128xf32>
    %3 = arith.truncf %2 : vector<128x128xf32> to vector<128x128xbf16>
    %c0_3 = arith.constant 0 : index
    %c0_4 = arith.constant 0 : index
    %4 = vector.load %arg4[%c0_3, %c0_4] : memref<128x128xbf16, #tpu.memory_space<vmem>>, vector<128x128xbf16>
    tpu.vector_store %arg4[%c0_3, %c0_4], %3 {strides = array<i32>} : memref<128x128xbf16, #tpu.memory_space<vmem>>, vector<128x128xbf16>,
    %c0_i32 = arith.constant 0 : i32
    %5 = arith.cmpi eq, %arg1, %c0_i32 : i32
    %6 = arith.extui %5 : i1 to i32
    %c0_i32_5 = arith.constant 0 : i32
    %7 = arith.cmpi ne, %6, %c0_i32_5 : i32
    scf.if %7 {
      %cst_20 = arith.constant 0.000000e+00 : f32
      %20 = vector.broadcast %cst_20 : f32 to vector<1x8x128xf32>
      %c0_21 = arith.constant 0 : index
      %c0_22 = arith.constant 0 : index
      %c0_23 = arith.constant 0 : index
      %21 = vector.load %arg5[%c0_21, %c0_22, %c0_23] : memref<1x8x128xf32, #tpu.memory_space<vmem>>, vector<1x8x128xf32>
      tpu.vector_store %arg5[%c0_21, %c0_22, %c0_23], %20 {strides = array<i32>} : memref<1x8x128xf32, #tpu.memory_space<vmem>>, vector<1x8x128xf32>,
      %cst_24 = arith.constant 0.000000e+00 : f32
      %22 = vector.broadcast %cst_24 : f32 to vector<1x8x128xf32>
      %c0_25 = arith.constant 0 : index
      %c0_26 = arith.constant 0 : index
      %c0_27 = arith.constant 0 : index
      %23 = vector.load %arg6[%c0_25, %c0_26, %c0_27] : memref<1x8x128xf32, #tpu.memory_space<vmem>>, vector<1x8x128xf32>
      tpu.vector_store %arg6[%c0_25, %c0_26, %c0_27], %22 {strides = array<i32>} : memref<1x8x128xf32, #tpu.memory_space<vmem>>, vector<1x8x128xf32>,
    } else {
    }
    %8 = vector.shape_cast %2 : vector<128x128xf32> to vector<16x8x128xf32>
    %c0_6 = arith.constant 0 : index
    %c0_7 = arith.constant 0 : index
    %c0_8 = arith.constant 0 : index
    %9 = vector.load %arg5[%c0_6, %c0_7, %c0_8] : memref<1x8x128xf32, #tpu.memory_space<vmem>>, vector<1x8x128xf32>
    %cst_9 = arith.constant dense<0.000000e+00> : vector<8x128xf32>
    %10 = vector.multi_reduction <add>, %8, %cst_9 [0] : vector<16x8x128xf32> to vector<8x128xf32>
    %11 = vector.shape_cast %10 : vector<8x128xf32> to vector<1x8x128xf32>
    %12 = arith.addf %9, %11 : vector<1x8x128xf32>
    %c0_10 = arith.constant 0 : index
    %c0_11 = arith.constant 0 : index
    %c0_12 = arith.constant 0 : index
    %13 = vector.load %arg5[%c0_10, %c0_11, %c0_12] : memref<1x8x128xf32, #tpu.memory_space<vmem>>, vector<1x8x128xf32>
    tpu.vector_store %arg5[%c0_10, %c0_11, %c0_12], %12 {strides = array<i32>} : memref<1x8x128xf32, #tpu.memory_space<vmem>>, vector<1x8x128xf32>,
    %c0_13 = arith.constant 0 : index
    %c0_14 = arith.constant 0 : index
    %c0_15 = arith.constant 0 : index
    %14 = vector.load %arg6[%c0_13, %c0_14, %c0_15] : memref<1x8x128xf32, #tpu.memory_space<vmem>>, vector<1x8x128xf32>
    %15 = arith.mulf %8, %8 : vector<16x8x128xf32>
    %cst_16 = arith.constant dense<0.000000e+00> : vector<8x128xf32>
    %16 = vector.multi_reduction <add>, %15, %cst_16 [0] : vector<16x8x128xf32> to vector<8x128xf32>
    %17 = vector.shape_cast %16 : vector<8x128xf32> to vector<1x8x128xf32>
    %18 = arith.addf %14, %17 : vector<1x8x128xf32>
    %c0_17 = arith.constant 0 : index
    %c0_18 = arith.constant 0 : index
    %c0_19 = arith.constant 0 : index
    %19 = vector.load %arg6[%c0_17, %c0_18, %c0_19] : memref<1x8x128xf32, #tpu.memory_space<vmem>>, vector<1x8x128xf32>
    tpu.vector_store %arg6[%c0_17, %c0_18, %c0_19], %18 {strides = array<i32>} : memref<1x8x128xf32, #tpu.memory_space<vmem>>, vector<1x8x128xf32>,
    return
  }
  func.func @transform_0(%arg0: i32, %arg1: i32) -> (i32, i32) {
    %c2_i32 = arith.constant 2 : i32
    %0 = arith.muli %arg0, %c2_i32 : i32
    %1 = arith.addi %0, %arg1 : i32
    %c0_i32 = arith.constant 0 : i32
    %c0_i32_0 = arith.constant 0 : i32
    return %1, %c0_i32 : i32, i32
  }
  func.func @transform_1(%arg0: i32, %arg1: i32) -> (i32, i32) {
    %c0_i32 = arith.constant 0 : i32
    %c0_i32_0 = arith.constant 0 : i32
    %c0_i32_1 = arith.constant 0 : i32
    return %c0_i32, %c0_i32_0 : i32, i32
  }
  func.func @transform_2(%arg0: i32, %arg1: i32) -> (i32, i32) {
    %c2_i32 = arith.constant 2 : i32
    %0 = arith.muli %arg0, %c2_i32 : i32
    %1 = arith.addi %0, %arg1 : i32
    %c0_i32 = arith.constant 0 : i32
    %c0_i32_0 = arith.constant 0 : i32
    return %1, %c0_i32 : i32, i32
  }
  func.func @transform_3(%arg0: i32, %arg1: i32) -> (i32, i32, i32) {
    %c0_i32 = arith.constant 0 : i32
    %c0_i32_0 = arith.constant 0 : i32
    %c0_i32_1 = arith.constant 0 : i32
    return %arg0, %c0_i32, %c0_i32_0 : i32, i32, i32
  }
  func.func @transform_4(%arg0: i32, %arg1: i32) -> (i32, i32, i32) {
    %c0_i32 = arith.constant 0 : i32
    %c0_i32_0 = arith.constant 0 : i32
    %c0_i32_1 = arith.constant 0 : i32
    return %arg0, %c0_i32, %c0_i32_0 : i32, i32, i32
  }
}

</mosaic_0001>

<llo_original>
// kernel: tpu_custom_call.1
$region0: #{tpu_custom_call.1}
  #allocation0 [shape = 'u32[]', space=smem, size = 0x4, offset = 0x4, fixed_abs, tag = 'smem constant byte address 0x4 - core index']
  #allocation1 [shape = 'u32[144,128]{1,0:T(1,128)}', space=vmem, size = 0x12000, scoped, tag = 'internal scratch']
  %s0 = inlined_call_operand.hbm [shape: bf16[512,128], index: 0, kind: input, shape index: {}]
  %s1 = inlined_call_operand.hbm [shape: bf16[128,128], index: 1, kind: input, shape index: {}]
  %s2 = inlined_call_operand.hbm [shape: bf16[512,128], index: 2, kind: output, shape index: {0}]
  %s3 = inlined_call_operand.hbm [shape: f32[2,8,128], index: 3, kind: output, shape index: {1}]
  %s4 = inlined_call_operand.hbm [shape: f32[2,8,128], index: 4, kind: output, shape index: {2}]
  %5 = xla_tuple %s2, %s3, %s4
  %s6 = sld [smem:[#allocation0]]
  $region69: #{tpu_custom_call.1} parent=0
    _
  %s8 = ssub.s32 1, %s6
  %s9 = scalar_select 0, %s8, %s6
  $region1: #{tpu_custom_call.1} parent=0
    #allocation2 [shape = 'u8[65536]{0}', space=vmem, size = 0x10000, scoped, tag = 'input window, operand 0']
    #allocation3 [shape = 's32[2]{0}', space=sflag, size = 0x8, scoped, tag = 'scoped memory for tpu_custom_call.1']
    #allocation4 [shape = 's32[2]{0}', space=sflag, size = 0x8, scoped, tag = 'scoped memory for tpu_custom_call.1']
    #allocation5 [shape = 'u8[32768]{0}', space=vmem, size = 0x8000, scoped, tag = 'input window, operand 1, single buffered']
    #allocation6 [shape = 's32[1]{0}', space=sflag, size = 0x4, scoped, tag = 'scoped memory for tpu_custom_call.1']
    #allocation7 [shape = 'u8[65536]{0}', space=vmem, size = 0x10000, scoped, tag = 'output window, operand 0']
    #allocation8 [shape = 'u8[8192]{0}', space=vmem, size = 0x2000, scoped, tag = 'output window, operand 1']
    #allocation9 [shape = 's32[2]{0}', space=sflag, size = 0x8, scoped, tag = 'scoped memory for tpu_custom_call.1']
    #allocation10 [shape = 'u8[8192]{0}', space=vmem, size = 0x2000, scoped, tag = 'output window, operand 2']
    %10 = vsyncpa [#allocation3], 0
    %s11 = scalar_lea.sflag [#allocation3], 1
    %12 = vsyncpa %s11, 0
    %13 = vsyncpa [#allocation6], 0
    %14 = vsyncpa [#allocation4], 0
    %s15 = scalar_lea.sflag [#allocation4], 1
    %16 = vsyncpa %s15, 0
    %17 = vsyncpa [#allocation9], 0
    %s18 = scalar_lea.sflag [#allocation9], 1
    %19 = vsyncpa %s18, 0
    loop: start=0, step=1, limit=6
    $region2: #{tpu_custom_call.1} parent=1 // loop_pre_header
      _
    $region3: #{tpu_custom_call.1} parent=1 // loop_header
      %s21 = sphi 0, %s25
      %p22 = scmp.ge.s32.totalorder %s21, 6
      %s28 = sphi 0, %s40
      %s29 = sphi 0, %s36
      %s30 = sphi 0, %s28
      %s31 = sphi 0, %s29
      %s32 = sphi 0, %s30
      %s33 = sphi 0, %s31
      %s47 = sphi 0, %s49
      %s50 = sphi 0, %s47
      %s51 = sphi 0, %s50
      %s67 = sphi 0, %s51
      %s71 = sphi 0, %s71
      %s73 = sphi 0, %s71
      %s74 = sphi 0, %s73
      %s88 = sphi 0, %s74
      %s98 = sphi 0, %s100
      %s101 = sphi 0, %s98
      %s102 = sphi 0, %s101
      %s118 = sphi 0, %s102
      %s124 = sphi 0, %s126
      %s127 = sphi 0, %s124
      %s128 = sphi 0, %s127
      %s144 = sphi 0, %s128
      %s150 = sphi 0, %s152
      %s153 = sphi 0, %s150
      %s154 = sphi 0, %s153
      %s170 = sphi 0, %s154
    $region4: #{tpu_custom_call.1} parent=1 // loop_header_branch
      %24 = sbr.rel (%p22) target = $region8
    $region5: #{tpu_custom_call.1} parent=1 // loop_body
      %s26 = ssub.s32 %s21, 1
      %s27 = ssub.s32 %s21, 2
      %s34 = sadd.s32 1, %s29
      %p35 = scmp.ge.s32.totalorder %s34, 2
      %s36 = scalar_select %p35, 0, %s34
      %s37 = sadd.s32 1, %s28
      %s38 = scalar_select %p35, %s37, %s28
      %p39 = scmp.ge.s32.totalorder %s38, 2
      %s40 = scalar_select %p39, 0, %s38
      %s41 = smul.u32 %s28, 2
      %s42 = sadd.s32 %s41, %s29
      %s43 = smul.u32 %s40, 2
      %s44 = sadd.s32 %s43, %s36
      %s45 = ssub.s32 %s42, %s44
      %p46 = scmp.eq.s32.totalorder %s45, 0
      %s48 = sadd.s32 %s47, 1
      %s49 = scalar_select %p46, %s47, %s48
      %p52 = pneg %p46
      %p53 = scmp.eq.s32.totalorder %s21, 3
      %p54 = por %p52, %p53
      %p55 = scmp.ne.s32.totalorder %s47, %s50
      %p56 = scmp.eq.s32.totalorder %s21, 0
      %p57 = por %p55, %p56
      %p58 = scmp.ne.s32.totalorder %s47, %s50
      %p59 = scmp.eq.s32.totalorder %s26, 3
      %p60 = por %p58, %p59
      %p61 = scmp.ne.s32.totalorder %s50, %s51
      %p62 = scmp.eq.s32.totalorder %s26, 0
      %p63 = por %p61, %p62
      %p64 = scmp.ne.s32.totalorder %s50, %s51
      %p65 = scmp.eq.s32.totalorder %s27, 3
      %p66 = por %p64, %p65
      %p68 = scmp.ne.s32.totalorder %s51, %s67
      %p69 = scmp.eq.s32.totalorder %s27, 0
      %p70 = por %p68, %p69
      %s72 = sadd.s32 %s71, 1
      %p75 = scmp.eq.s32.totalorder %s21, 3
      %p76 = scmp.ne.s32.totalorder %s71, %s73
      %p77 = scmp.eq.s32.totalorder %s21, 0
      %p78 = por %p76, %p77
      %p79 = scmp.ne.s32.totalorder %s71, %s73
      %p80 = scmp.eq.s32.totalorder %s26, 3
      %p81 = por %p79, %p80
      %p82 = scmp.ne.s32.totalorder %s73, %s74
      %p83 = scmp.eq.s32.totalorder %s26, 0
      %p84 = por %p82, %p83
      %p85 = scmp.ne.s32.totalorder %s73, %s74
      %p86 = scmp.eq.s32.totalorder %s27, 3
      %p87 = por %p85, %p86
      %p89 = scmp.ne.s32.totalorder %s74, %s88
      %p90 = scmp.eq.s32.totalorder %s27, 0
      %p91 = por %p89, %p90
      %s92 = smul.u32 %s28, 2
      %s93 = sadd.s32 %s92, %s29
      %s94 = smul.u32 %s40, 2
      %s95 = sadd.s32 %s94, %s36
      %s96 = ssub.s32 %s93, %s95
      %p97 = scmp.eq.s32.totalorder %s96, 0
      %s99 = sadd.s32 %s98, 1
      %s100 = scalar_select %p97, %s98, %s99
      %p103 = pneg %p97
      %p104 = scmp.eq.s32.totalorder %s21, 3
      %p105 = por %p103, %p104
      %p106 = scmp.ne.s32.totalorder %s98, %s101
      %p107 = scmp.eq.s32.totalorder %s21, 0
      %p108 = por %p106, %p107
      %p109 = scmp.ne.s32.totalorder %s98, %s101
      %p110 = scmp.eq.s32.totalorder %s26, 3
      %p111 = por %p109, %p110
      %p112 = scmp.ne.s32.totalorder %s101, %s102
      %p113 = scmp.eq.s32.totalorder %s26, 0
      %p114 = por %p112, %p113
      %p115 = scmp.ne.s32.totalorder %s101, %s102
      %p116 = scmp.eq.s32.totalorder %s27, 3
      %p117 = por %p115, %p116
      %p119 = scmp.ne.s32.totalorder %s102, %s118
      %p120 = scmp.eq.s32.totalorder %s27, 0
      %p121 = por %p119, %p120
      %s122 = ssub.s32 %s28, %s40
      %p123 = scmp.eq.s32.totalorder %s122, 0
      %s125 = sadd.s32 %s124, 1
      %s126 = scalar_select %p123, %s124, %s125
      %p129 = pneg %p123
      %p130 = scmp.eq.s32.totalorder %s21, 3
      %p131 = por %p129, %p130
      %p132 = scmp.ne.s32.totalorder %s124, %s127
      %p133 = scmp.eq.s32.totalorder %s21, 0
      %p134 = por %p132, %p133
      %p135 = scmp.ne.s32.totalorder %s124, %s127
      %p136 = scmp.eq.s32.totalorder %s26, 3
      %p137 = por %p135, %p136
      %p138 = scmp.ne.s32.totalorder %s127, %s128
      %p139 = scmp.eq.s32.totalorder %s26, 0
      %p140 = por %p138, %p139
      %p141 = scmp.ne.s32.totalorder %s127, %s128
      %p142 = scmp.eq.s32.totalorder %s27, 3
      %p143 = por %p141, %p142
      %p145 = scmp.ne.s32.totalorder %s128, %s144
      %p146 = scmp.eq.s32.totalorder %s27, 0
      %p147 = por %p145, %p146
      %s148 = ssub.s32 %s28, %s40
      %p149 = scmp.eq.s32.totalorder %s148, 0
      %s151 = sadd.s32 %s150, 1
      %s152 = scalar_select %p149, %s150, %s151
      %p155 = pneg %p149
      %p156 = scmp.eq.s32.totalorder %s21, 3
      %p157 = por %p155, %p156
      %p158 = scmp.ne.s32.totalorder %s150, %s153
      %p159 = scmp.eq.s32.totalorder %s21, 0
      %p160 = por %p158, %p159
      %p161 = scmp.ne.s32.totalorder %s150, %s153
      %p162 = scmp.eq.s32.totalorder %s26, 3
      %p163 = por %p161, %p162
      %p164 = scmp.ne.s32.totalorder %s153, %s154
      %p165 = scmp.eq.s32.totalorder %s26, 0
      %p166 = por %p164, %p165
      %p167 = scmp.ne.s32.totalorder %s153, %s154
      %p168 = scmp.eq.s32.totalorder %s27, 3
      %p169 = por %p167, %p168
      %p171 = scmp.ne.s32.totalorder %s154, %s170
      %p172 = scmp.eq.s32.totalorder %s27, 0
      %p173 = por %p171, %p172
      %p174 = scmp.le.s32.totalorder 1, %s21
      %p175 = scmp.lt.s32.totalorder %s21, 5
      %p176 = pnand %p174, %p175
      %p177 = pneg %p176
      // Predicated region
      $region9: #{tpu_custom_call.1} parent=5 // pred_check
        _
      $region10: #{tpu_custom_call.1} parent=5 // pred_check_branch
        %179 = sbr.rel (%p176) target = $region12
      $region11: #{tpu_custom_call.1} parent=5 // pred_region
        %s180 = ssub.s32 %s21, 1
        // Predicated region
        $region13: #{tpu_custom_call.1} parent=11 // pred_check
          %p181 = pneg %p84
        $region14: #{tpu_custom_call.1} parent=11 // pred_check_branch
          %183 = sbr.rel (%p181) target = $region16
        $region15: #{tpu_custom_call.1} parent=11 // pred_region
          %s185 = ssub.s32 1024, 1024
          %186 = vsyncadd [#allocation6], %s185
          %s187 = sshll.u32 [#allocation5], 4
          %s188 = int_to_ptr.vmem [resolvable:$true] %s187
          %193 = dma.hbm_to_vmem [thread:$0]  %s1, 1024, %s188, [#allocation6], 64, 64, 4
        $region16: #{tpu_custom_call.1} parent=11 // pred_fallthru
          _
      $region12: #{tpu_custom_call.1} parent=5 // pred_fallthru
        _
      %p194 = scmp.lt.s32.totalorder %s21, 4
      // Predicated region
      $region17: #{tpu_custom_call.1} parent=5 // pred_check
        %p195 = pneg %p194
      $region18: #{tpu_custom_call.1} parent=5 // pred_check_branch
        %197 = sbr.rel (%p195) target = $region20
      $region19: #{tpu_custom_call.1} parent=5 // pred_region
        // Predicated region
        $region21: #{tpu_custom_call.1} parent=19 // pred_check
          %p198 = pneg %p57
        $region22: #{tpu_custom_call.1} parent=19 // pred_check_branch
          %200 = sbr.rel (%p198) target = $region24
        $region23: #{tpu_custom_call.1} parent=19 // pred_region
          %s201 = sand.u32 %s47, 1
          %s202 = scalar_lea.sflag [#allocation3], %s201
          %s203 = sand.u32 %s47, 1
          %s204 = smul.addr %s203, 64
          %s205 = scalar_lea.vmem [#allocation2], %s204
          %s206 = smul.u32 %s28, 2
          %s207 = sadd.s32 %s206, %s29
          %s208 = smul.u32 16, %s207
          %s210 = ssub.s32 1024, 1024
          %211 = vsyncadd %s202, %s210
          %s212 = smul.addr %s208, 64
          %s213 = scalar_lea.hbm %s0, %s212
          %s214 = sshll.u32 %s205, 4
          %s215 = int_to_ptr.vmem [resolvable:$true] %s214
          %220 = dma.hbm_to_vmem [thread:$0]  %s213, 1024, %s215, %s202, 64, 64, 4
        $region24: #{tpu_custom_call.1} parent=19 // pred_fallthru
          _
      $region20: #{tpu_custom_call.1} parent=5 // pred_fallthru
        _
      %p221 = scmp.le.s32.totalorder 1, %s21
      %p222 = scmp.lt.s32.totalorder %s21, 5
      %p223 = pnand %p221, %p222
      %p224 = pneg %p223
      // Predicated region
      $region25: #{tpu_custom_call.1} parent=5 // pred_check
        _
      $region26: #{tpu_custom_call.1} parent=5 // pred_check_branch
        %226 = sbr.rel (%p223) target = $region28
      $region27: #{tpu_custom_call.1} parent=5 // pred_region
        %s227 = ssub.s32 %s21, 1
        %s228 = sand.u32 %s50, 1
        %s229 = scalar_lea.sflag [#allocation3], %s228
        %s230 = sand.u32 %s50, 1
        %s231 = smul.addr %s230, 64
        %s232 = scalar_lea.vmem [#allocation2], %s231
        // Predicated region
        $region29: #{tpu_custom_call.1} parent=27 // pred_check
          %p233 = pneg %p63
        $region30: #{tpu_custom_call.1} parent=27 // pred_check_branch
          %235 = sbr.rel (%p233) target = $region32
        $region31: #{tpu_custom_call.1} parent=27 // pred_region
          %236 = dma.done %s229, 1024
        $region32: #{tpu_custom_call.1} parent=27 // pred_fallthru
          _
        // Predicated region
        $region33: #{tpu_custom_call.1} parent=27 // pred_check
          %p237 = pneg %p84
        $region34: #{tpu_custom_call.1} parent=27 // pred_check_branch
          %239 = sbr.rel (%p237) target = $region36
        $region35: #{tpu_custom_call.1} parent=27 // pred_region
          %240 = dma.done [#allocation6], 1024
        $region36: #{tpu_custom_call.1} parent=27 // pred_fallthru
          _
        %s241 = sand.u32 %s50, 1
        %s242 = scalar_lea.sflag [#allocation3], %s241
        %s243 = sand.u32 %s50, 1
        %s244 = smul.addr %s243, 64
        %s245 = scalar_lea.vmem [#allocation2], %s244
        %p246 = pneg %p63
        %p247 = pneg %p60
        %p248 = pneg %p84
        %p249 = pneg %p81
        %p250 = pneg %p114
        %p251 = pneg %p111
        %s252 = sand.u32 %s101, 1
        %s253 = scalar_lea.sflag [#allocation4], %s252
        %s254 = sand.u32 %s101, 1
        %s255 = smul.addr %s254, 64
        %s256 = scalar_lea.vmem [#allocation7], %s255
        %p257 = pneg %p140
        %p258 = pneg %p137
        %s259 = sand.u32 %s26, 1
        %s260 = scalar_lea.sflag [#allocation9], %s259
        %s261 = sand.u32 %s127, 1
        %s262 = smul.addr %s261, 8
        %s263 = scalar_lea.vmem [#allocation8], %s262
        %p264 = pneg %p166
        %p265 = pneg %p163
        %s266 = sand.u32 %s26, 1
        %s267 = scalar_lea.sflag [#allocation9], %s266
        %s268 = sand.u32 %s153, 1
        %s269 = smul.addr %s268, 8
        %s270 = scalar_lea.vmem [#allocation10], %s269
        %s271 = smul.u32 %s30, 2
        %s272 = sadd.s32 %s271, %s31
        %s273 = smul.u32 16, %s272
        %s274 = smul.u32 %s30, 2
        %s275 = sadd.s32 %s274, %s31
        %s276 = smul.u32 16, %s275
        %v278 = vld [vmem:[%s232] sm:$0xf]
        %v279 = vld [vmem:[%s232 + $0x4] sm:$0xf]
        %v280 = vld [vmem:[%s232 + $0x8] sm:$0xf]
        %v281 = vld [vmem:[%s232 + $0xc] sm:$0xf]
        %v282 = vld [vmem:[%s232 + $0x10] sm:$0xf]
        %v283 = vld [vmem:[%s232 + $0x14] sm:$0xf]
        %v284 = vld [vmem:[%s232 + $0x18] sm:$0xf]
        %v285 = vld [vmem:[%s232 + $0x1c] sm:$0xf]
        %v286 = vld [vmem:[%s232 + $0x20] sm:$0xf]
        %v287 = vld [vmem:[%s232 + $0x24] sm:$0xf]
        %v288 = vld [vmem:[%s232 + $0x28] sm:$0xf]
        %v289 = vld [vmem:[%s232 + $0x2c] sm:$0xf]
        %v290 = vld [vmem:[%s232 + $0x30] sm:$0xf]
        %v291 = vld [vmem:[%s232 + $0x34] sm:$0xf]
        %v292 = vld [vmem:[%s232 + $0x38] sm:$0xf]
        %v293 = vld [vmem:[%s232 + $0x3c] sm:$0xf]
        %v294 = vld [vmem:[#allocation5] sm:$0xf]
        %v295 = vld [vmem:[#allocation5 + $0x4] sm:$0xf]
        %v296 = vld [vmem:[#allocation5 + $0x8] sm:$0xf]
        %v297 = vld [vmem:[#allocation5 + $0xc] sm:$0xf]
        %v298 = vld [vmem:[#allocation5 + $0x10] sm:$0xf]
        %v299 = vld [vmem:[#allocation5 + $0x14] sm:$0xf]
        %v300 = vld [vmem:[#allocation5 + $0x18] sm:$0xf]
        %v301 = vld [vmem:[#allocation5 + $0x1c] sm:$0xf]
        %v302 = vld [vmem:[#allocation5 + $0x20] sm:$0xf]
        %v303 = vld [vmem:[#allocation5 + $0x24] sm:$0xf]
        %v304 = vld [vmem:[#allocation5 + $0x28] sm:$0xf]
        %v305 = vld [vmem:[#allocation5 + $0x2c] sm:$0xf]
        %v306 = vld [vmem:[#allocation5 + $0x30] sm:$0xf]
        %v307 = vld [vmem:[#allocation5 + $0x34] sm:$0xf]
        %v308 = vld [vmem:[#allocation5 + $0x38] sm:$0xf]
        %v309 = vld [vmem:[#allocation5 + $0x3c] sm:$0xf]
        %v326 = vunpack.c.l.b16 %v278
        %v327 = vunpack.c.l.b16 %v279
        %v328 = vunpack.c.l.b16 %v280
        %v329 = vunpack.c.l.b16 %v281
        %v330 = vunpack.c.l.b16 %v282
        %v331 = vunpack.c.l.b16 %v283
        %v332 = vunpack.c.l.b16 %v284
        %v333 = vunpack.c.l.b16 %v285
        %v334 = vunpack.c.l.b16 %v286
        %v335 = vunpack.c.l.b16 %v287
        %v336 = vunpack.c.l.b16 %v288
        %v337 = vunpack.c.l.b16 %v289
        %v338 = vunpack.c.l.b16 %v290
        %v339 = vunpack.c.l.b16 %v291
        %v340 = vunpack.c.l.b16 %v292
        %v341 = vunpack.c.l.b16 %v293
        %v342 = vpack.c.b16 %v327, %v326
        %v343 = vpack.c.b16 %v329, %v328
        %v344 = vpack.c.b16 %v331, %v330
        %v345 = vpack.c.b16 %v333, %v332
        %v346 = vpack.c.b16 %v335, %v334
        %v347 = vpack.c.b16 %v337, %v336
        %v348 = vpack.c.b16 %v339, %v338
        %v349 = vpack.c.b16 %v341, %v340
        %v374 = vunpack.c.l.b16 %v294
        %v375 = vunpack.c.l.b16 %v295
        %v376 = vunpack.c.l.b16 %v296
        %v377 = vunpack.c.l.b16 %v297
        %v378 = vunpack.c.l.b16 %v298
        %v379 = vunpack.c.l.b16 %v299
        %v380 = vunpack.c.l.b16 %v300
        %v381 = vunpack.c.l.b16 %v301
        %v382 = vunpack.c.l.b16 %v302
        %v383 = vunpack.c.l.b16 %v303
        %v384 = vunpack.c.l.b16 %v304
        %v385 = vunpack.c.l.b16 %v305
        %v386 = vunpack.c.l.b16 %v306
        %v387 = vunpack.c.l.b16 %v307
        %v388 = vunpack.c.l.b16 %v308
        %v389 = vunpack.c.l.b16 %v309
        %v390 = vpack.c.b16 %v375, %v374
        %v391 = vpack.c.b16 %v377, %v376
        %v392 = vpack.c.b16 %v379, %v378
        %v393 = vpack.c.b16 %v381, %v380
        %v394 = vpack.c.b16 %v383, %v382
        %v395 = vpack.c.b16 %v385, %v384
        %v396 = vpack.c.b16 %v387, %v386
        %v397 = vpack.c.b16 %v389, %v388
        %406 = vmatprep.subr.bf16.mxu0 0
        %407 = vmatpush1.bf16.msra.mxu0 %v390
        %408 = vmatprep.subr.bf16.mxu0 0
        %409 = vmatpush1.bf16.msra.mxu0 %v391
        %410 = vmatprep.subr.bf16.mxu0 0
        %411 = vmatpush1.bf16.msra.mxu0 %v392
        %412 = vmatprep.subr.bf16.mxu0 0
        %413 = vmatpush1.bf16.msra.mxu0 %v393
        %414 = vmatprep.subr.bf16.mxu0 0
        %415 = vmatpush1.bf16.msra.mxu0 %v394
        %416 = vmatprep.subr.bf16.mxu0 0
        %417 = vmatpush1.bf16.msra.mxu0 %v395
        %418 = vmatprep.subr.bf16.mxu0 0
        %419 = vmatpush1.bf16.msra.mxu0 %v396
        %420 = vmatprep.subr.bf16.mxu0 0
        %421 = vmatpush1.bf16.msra.mxu0 %v397
        %422 = vmatprep.subr.bf16.mxu0 0
        %423 = vmatpush1.bf16.msra.mxu0 0
        %424 = vmatprep.subr.bf16.mxu0 0
        %425 = vmatpush1.bf16.msra.mxu0 0
        %426 = vmatprep.subr.bf16.mxu0 0
        %427 = vmatpush1.bf16.msra.mxu0 0
        %428 = vmatprep.subr.bf16.mxu0 0
        %429 = vmatpush1.bf16.msra.mxu0 0
        %430 = vmatprep.subr.bf16.mxu0 0
        %431 = vmatpush1.bf16.msra.mxu0 0
        %432 = vmatprep.subr.bf16.mxu0 0
        %433 = vmatpush1.bf16.msra.mxu0 0
        %434 = vmatprep.subr.bf16.mxu0 0
        %435 = vmatpush1.bf16.msra.mxu0 0
        %436 = vmatprep.subr.bf16.mxu0 0
        %437 = vmatpush1.bf16.msra.mxu0 0
        %438 = vmatprep.mubr.bf16.mxu0 0
        %439 = vmatmul.mubr.bf16.gmra.mrb[0].mxu0 %v342
        %v440 = vpop.f32.mrb[0].mxu0
        %v441 = vadd.f32 0.0, %v440
        %v442 = vpop.f32.mrb[0].mxu0
        %v443 = vpop.f32.mrb[0].mxu0
        %v444 = vadd.f32 0.0, %v443
        %v445 = vpop.f32.mrb[0].mxu0
        %446 = vmatprep.mubr.bf16.mxu0 0
        %447 = vmatmul.mubr.bf16.gmra.mrb[0].mxu0 %v343
        %v448 = vpop.f32.mrb[0].mxu0
        %v449 = vadd.f32 0.0, %v448
        %v450 = vpop.f32.mrb[0].mxu0
        %v451 = vpop.f32.mrb[0].mxu0
        %v452 = vadd.f32 0.0, %v451
        %v453 = vpop.f32.mrb[0].mxu0
        %454 = vmatprep.mubr.bf16.mxu0 0
        %455 = vmatmul.mubr.bf16.gmra.mrb[0].mxu0 %v344
        %v456 = vpop.f32.mrb[0].mxu0
        %v457 = vadd.f32 0.0, %v456
        %v458 = vpop.f32.mrb[0].mxu0
        %v459 = vpop.f32.mrb[0].mxu0
        %v460 = vadd.f32 0.0, %v459
        %v461 = vpop.f32.mrb[0].mxu0
        %462 = vmatprep.mubr.bf16.mxu0 0
        %463 = vmatmul.mubr.bf16.gmra.mrb[0].mxu0 %v345
        %v464 = vpop.f32.mrb[0].mxu0
        %v465 = vadd.f32 0.0, %v464
        %v466 = vpop.f32.mrb[0].mxu0
        %v467 = vpop.f32.mrb[0].mxu0
        %v468 = vadd.f32 0.0, %v467
        %v469 = vpop.f32.mrb[0].mxu0
        %470 = vmatprep.mubr.bf16.mxu0 0
        %471 = vmatmul.mubr.bf16.gmra.mrb[0].mxu0 %v346
        %v472 = vpop.f32.mrb[0].mxu0
        %v473 = vadd.f32 0.0, %v472
        %v474 = vpop.f32.mrb[0].mxu0
        %v475 = vpop.f32.mrb[0].mxu0
        %v476 = vadd.f32 0.0, %v475
        %v477 = vpop.f32.mrb[0].mxu0
        %478 = vmatprep.mubr.bf16.mxu0 0
        %479 = vmatmul.mubr.bf16.gmra.mrb[0].mxu0 %v347
        %v480 = vpop.f32.mrb[0].mxu0
        %v481 = vadd.f32 0.0, %v480
        %v482 = vpop.f32.mrb[0].mxu0
        %v483 = vpop.f32.mrb[0].mxu0
        %v484 = vadd.f32 0.0, %v483
        %v485 = vpop.f32.mrb[0].mxu0
        %486 = vmatprep.mubr.bf16.mxu0 0
        %487 = vmatmul.mubr.bf16.gmra.mrb[0].mxu0 %v348
        %v488 = vpop.f32.mrb[0].mxu0
        %v489 = vadd.f32 0.0, %v488
        %v490 = vpop.f32.mrb[0].mxu0
        %v491 = vpop.f32.mrb[0].mxu0
        %v492 = vadd.f32 0.0, %v491
        %v493 = vpop.f32.mrb[0].mxu0
        %494 = vmatprep.mubr.bf16.mxu0 0
        %495 = vmatmul.mubr.bf16.gmra.mrb[0].mxu0 %v349
        %v496 = vpop.f32.mrb[0].mxu0
        %v497 = vadd.f32 0.0, %v496
        %v498 = vpop.f32.mrb[0].mxu0
        %v499 = vpop.f32.mrb[0].mxu0
        %v500 = vadd.f32 0.0, %v499
        %v501 = vpop.f32.mrb[0].mxu0
        %502 = vdwg.mxu0
        %v503 = vpack.c.bf16 %v444, %v441
        %v504 = vpack.c.bf16 %v452, %v449
        %v505 = vpack.c.bf16 %v460, %v457
        %v506 = vpack.c.bf16 %v468, %v465
        %v507 = vpack.c.bf16 %v476, %v473
        %v508 = vpack.c.bf16 %v484, %v481
        %v509 = vpack.c.bf16 %v492, %v489
        %v510 = vpack.c.bf16 %v500, %v497
        %v519 = vunpack.c.l.b16 %v503
        %v520 = vunpack.c.h.b16 %v503
        %v521 = vunpack.c.l.b16 %v504
        %v522 = vunpack.c.h.b16 %v504
        %v523 = vunpack.c.l.b16 %v505
        %v524 = vunpack.c.h.b16 %v505
        %v525 = vunpack.c.l.b16 %v506
        %v526 = vunpack.c.h.b16 %v506
        %v527 = vunpack.c.l.b16 %v507
        %v528 = vunpack.c.h.b16 %v507
        %v529 = vunpack.c.l.b16 %v508
        %v530 = vunpack.c.h.b16 %v508
        %v531 = vunpack.c.l.b16 %v509
        %v532 = vunpack.c.h.b16 %v509
        %v533 = vunpack.c.l.b16 %v510
        %v534 = vunpack.c.h.b16 %v510
        %v535 = vpack.c.b16 %v519, %v519
        %v536 = vpack.c.b16 %v520, %v520
        %v537 = vpack.c.b16 %v521, %v521
        %v538 = vpack.c.b16 %v522, %v522
        %v539 = vpack.c.b16 %v523, %v523
        %v540 = vpack.c.b16 %v524, %v524
        %v541 = vpack.c.b16 %v525, %v525
        %v542 = vpack.c.b16 %v526, %v526
        %v543 = vpack.c.b16 %v527, %v527
        %v544 = vpack.c.b16 %v528, %v528
        %v545 = vpack.c.b16 %v529, %v529
        %v546 = vpack.c.b16 %v530, %v530
        %v547 = vpack.c.b16 %v531, %v531
        %v548 = vpack.c.b16 %v532, %v532
        %v549 = vpack.c.b16 %v533, %v533
        %v550 = vpack.c.b16 %v534, %v534
        %567 = vst [vmem:[%s256] sm:$0xf] %v535
        %568 = vst [vmem:[%s256 + $0x4] sm:$0xf] %v536
        %569 = vst [vmem:[%s256 + $0x8] sm:$0xf] %v537
        %570 = vst [vmem:[%s256 + $0xc] sm:$0xf] %v538
        %571 = vst [vmem:[%s256 + $0x10] sm:$0xf] %v539
        %572 = vst [vmem:[%s256 + $0x14] sm:$0xf] %v540
        %573 = vst [vmem:[%s256 + $0x18] sm:$0xf] %v541
        %574 = vst [vmem:[%s256 + $0x1c] sm:$0xf] %v542
        %575 = vst [vmem:[%s256 + $0x20] sm:$0xf] %v543
        %576 = vst [vmem:[%s256 + $0x24] sm:$0xf] %v544
        %577 = vst [vmem:[%s256 + $0x28] sm:$0xf] %v545
        %578 = vst [vmem:[%s256 + $0x2c] sm:$0xf] %v546
        %579 = vst [vmem:[%s256 + $0x30] sm:$0xf] %v547
        %580 = vst [vmem:[%s256 + $0x34] sm:$0xf] %v548
        %581 = vst [vmem:[%s256 + $0x38] sm:$0xf] %v549
        %582 = vst [vmem:[%s256 + $0x3c] sm:$0xf] %v550
        %p583 = scmp.eq.s32.totalorder %s31, 0
        // Predicated region
        $region37: #{tpu_custom_call.1} parent=27 // pred_check
          %p584 = pneg %p583
        $region38: #{tpu_custom_call.1} parent=27 // pred_check_branch
          %586 = sbr.rel (%p584) target = $region40
        $region39: #{tpu_custom_call.1} parent=27 // pred_region
          %587 = vst [vmem:[%s263] sm:$0xff] 0.0
          %588 = vst [vmem:[%s270] sm:$0xff] 0.0
        $region40: #{tpu_custom_call.1} parent=27 // pred_fallthru
          _
        %v589 = vld [vmem:[%s263] sm:$0xff]
        %v590 = vadd.f32 %v441, %v444
        %v591 = vadd.f32 %v590, %v449
        %v592 = vadd.f32 %v591, %v452
        %v593 = vadd.f32 %v592, %v457
        %v594 = vadd.f32 %v593, %v460
        %v595 = vadd.f32 %v594, %v465
        %v596 = vadd.f32 %v595, %v468
        %v597 = vadd.f32 %v596, %v473
        %v598 = vadd.f32 %v597, %v476
        %v599 = vadd.f32 %v598, %v481
        %v600 = vadd.f32 %v599, %v484
        %v601 = vadd.f32 %v600, %v489
        %v602 = vadd.f32 %v601, %v492
        %v603 = vadd.f32 %v602, %v497
        %v604 = vadd.f32 %v603, %v500
        %v605 = vadd.f32 %v589, %v604
        %606 = vst [vmem:[%s263] sm:$0xff] %v605
        %v607 = vld [vmem:[%s270] sm:$0xff]
        %v608 = vmul.f32 %v441, %v441
        %v609 = vmul.f32 %v444, %v444
        %v610 = vmul.f32 %v449, %v449
        %v611 = vmul.f32 %v452, %v452
        %v612 = vmul.f32 %v457, %v457
        %v613 = vmul.f32 %v460, %v460
        %v614 = vmul.f32 %v465, %v465
        %v615 = vmul.f32 %v468, %v468
        %v616 = vmul.f32 %v473, %v473
        %v617 = vmul.f32 %v476, %v476
        %v618 = vmul.f32 %v481, %v481
        %v619 = vmul.f32 %v484, %v484
        %v620 = vmul.f32 %v489, %v489
        %v621 = vmul.f32 %v492, %v492
        %v622 = vmul.f32 %v497, %v497
        %v623 = vmul.f32 %v500, %v500
        %v624 = vadd.f32 %v608, %v609
        %v625 = vadd.f32 %v624, %v610
        %v626 = vadd.f32 %v625, %v611
        %v627 = vadd.f32 %v626, %v612
        %v628 = vadd.f32 %v627, %v613
        %v629 = vadd.f32 %v628, %v614
        %v630 = vadd.f32 %v629, %v615
        %v631 = vadd.f32 %v630, %v616
        %v632 = vadd.f32 %v631, %v617
        %v633 = vadd.f32 %v632, %v618
        %v634 = vadd.f32 %v633, %v619
        %v635 = vadd.f32 %v634, %v620
        %v636 = vadd.f32 %v635, %v621
        %v637 = vadd.f32 %v636, %v622
        %v638 = vadd.f32 %v637, %v623
        %v639 = vadd.f32 %v607, %v638
        %640 = vst [vmem:[%s270] sm:$0xff] %v639
        %s641 = sand.u32 %s101, 1
        %s642 = scalar_lea.sflag [#allocation4], %s641
        %s643 = sand.u32 %s101, 1
        %s644 = smul.addr %s643, 64
        %s645 = scalar_lea.vmem [#allocation7], %s644
        %s646 = sand.u32 %s26, 1
        %s647 = scalar_lea.sflag [#allocation9], %s646
        %s648 = sand.u32 %s127, 1
        %s649 = smul.addr %s648, 8
        %s650 = scalar_lea.vmem [#allocation8], %s649
        %s651 = sand.u32 %s26, 1
        %s652 = scalar_lea.sflag [#allocation9], %s651
        %s653 = sand.u32 %s153, 1
        %s654 = smul.addr %s653, 8
        %s655 = scalar_lea.vmem [#allocation10], %s654
        // Predicated region
        $region41: #{tpu_custom_call.1} parent=27 // pred_check
          %p656 = pneg %p111
        $region42: #{tpu_custom_call.1} parent=27 // pred_check_branch
          %658 = sbr.rel (%p656) target = $region44
        $region43: #{tpu_custom_call.1} parent=27 // pred_region
          %s659 = smul.u32 %s30, 2
          %s660 = sadd.s32 %s659, %s31
          %s661 = smul.u32 16, %s660
          %s663 = ssub.s32 1024, 1024
          %664 = vsyncadd %s642, %s663
          %s665 = smul.addr %s661, 64
          %s666 = scalar_lea.hbm %s2, %s665
          %s667 = sshll.u32 %s645, 4
          %s668 = int_to_ptr.vmem [resolvable:$true] %s667
          %673 = dma.vmem_to_hbm [thread:$0]  %s668, 1024, %s666, %s642, 64, 64, 4
        $region44: #{tpu_custom_call.1} parent=27 // pred_fallthru
          _
        // Predicated region
        $region45: #{tpu_custom_call.1} parent=27 // pred_check
          %p674 = pneg %p137
        $region46: #{tpu_custom_call.1} parent=27 // pred_check_branch
          %676 = sbr.rel (%p674) target = $region48
        $region47: #{tpu_custom_call.1} parent=27 // pred_region
          %s678 = ssub.s32 128, 128
          %679 = vsyncadd %s647, %s678
          %s680 = smul.addr %s30, 128
          %s681 = scalar_lea.hbm %s3, %s680
          %s683 = sshll.u32 %s650, 4
          %s684 = int_to_ptr.vmem [resolvable:$true] %s683
          %686 = dma.vmem_to_hbm [thread:$0]  %s684, 128, %s681, %s647
        $region48: #{tpu_custom_call.1} parent=27 // pred_fallthru
          _
        // Predicated region
        $region49: #{tpu_custom_call.1} parent=27 // pred_check
          %p687 = pneg %p163
        $region50: #{tpu_custom_call.1} parent=27 // pred_check_branch
          %689 = sbr.rel (%p687) target = $region52
        $region51: #{tpu_custom_call.1} parent=27 // pred_region
          %s691 = ssub.s32 128, 128
          %692 = vsyncadd %s652, %s691
          %s693 = smul.addr %s30, 128
          %s694 = scalar_lea.hbm %s4, %s693
          %s696 = sshll.u32 %s655, 4
          %s697 = int_to_ptr.vmem [resolvable:$true] %s696
          %699 = dma.vmem_to_hbm [thread:$0]  %s697, 128, %s694, %s652
        $region52: #{tpu_custom_call.1} parent=27 // pred_fallthru
          _
      $region28: #{tpu_custom_call.1} parent=5 // pred_fallthru
        _
      %p700 = scmp.le.s32.totalorder 2, %s21
      // Predicated region
      $region53: #{tpu_custom_call.1} parent=5 // pred_check
        %p701 = pneg %p700
      $region54: #{tpu_custom_call.1} parent=5 // pred_check_branch
        %703 = sbr.rel (%p701) target = $region56
      $region55: #{tpu_custom_call.1} parent=5 // pred_region
        %s704 = ssub.s32 %s21, 2
        // Predicated region
        $region57: #{tpu_custom_call.1} parent=55 // pred_check
          %p705 = pneg %p117
        $region58: #{tpu_custom_call.1} parent=55 // pred_check_branch
          %707 = sbr.rel (%p705) target = $region60
        $region59: #{tpu_custom_call.1} parent=55 // pred_region
          %s708 = sand.u32 %s102, 1
          %s709 = scalar_lea.sflag [#allocation4], %s708
          %s710 = sand.u32 %s102, 1
          %s711 = smul.addr %s710, 64
          %s712 = scalar_lea.vmem [#allocation7], %s711
          %713 = dma.done %s709, 1024
        $region60: #{tpu_custom_call.1} parent=55 // pred_fallthru
          _
        // Predicated region
        $region61: #{tpu_custom_call.1} parent=55 // pred_check
          %p714 = pneg %p143
        $region62: #{tpu_custom_call.1} parent=55 // pred_check_branch
          %716 = sbr.rel (%p714) target = $region64
        $region63: #{tpu_custom_call.1} parent=55 // pred_region
          %s717 = sand.u32 %s27, 1
          %s718 = scalar_lea.sflag [#allocation9], %s717
          %s719 = sand.u32 %s128, 1
          %s720 = smul.addr %s719, 8
          %s721 = scalar_lea.vmem [#allocation8], %s720
          %722 = dma.done %s718, 128
        $region64: #{tpu_custom_call.1} parent=55 // pred_fallthru
          _
        // Predicated region
        $region65: #{tpu_custom_call.1} parent=55 // pred_check
          %p723 = pneg %p169
        $region66: #{tpu_custom_call.1} parent=55 // pred_check_branch
          %725 = sbr.rel (%p723) target = $region68
        $region67: #{tpu_custom_call.1} parent=55 // pred_region
          %s726 = sand.u32 %s27, 1
          %s727 = scalar_lea.sflag [#allocation9], %s726
          %s728 = sand.u32 %s154, 1
          %s729 = smul.addr %s728, 8
          %s730 = scalar_lea.vmem [#allocation10], %s729
          %731 = dma.done %s727, 128
        $region68: #{tpu_custom_call.1} parent=55 // pred_fallthru
          _
      $region56: #{tpu_custom_call.1} parent=5 // pred_fallthru
        _
    $region6: #{tpu_custom_call.1} parent=1 // loop_footer
      %s25 = sadd.s32 1, %s21
    $region7: #{tpu_custom_call.1} parent=1 // loop_footer_branch
      %20 = sbr.rel target = $region3
    $region8: #{tpu_custom_call.1} parent=1 // loop_exit
      _
    %732 = vsyncpa [#allocation3], 1
    %s733 = scalar_lea.sflag [#allocation3], 1
    %734 = vsyncpa %s733, 1
    %735 = vsyncpa [#allocation6], 1
    %736 = vsyncpa [#allocation4], 1
    %s737 = scalar_lea.sflag [#allocation4], 1
    %738 = vsyncpa %s737, 1
    %739 = vsyncpa [#allocation9], 1
    %s740 = scalar_lea.sflag [#allocation9], 1
    %741 = vsyncpa %s740, 1

// kernel: tpu_custom_call.1
$region0: #{tpu_custom_call.1}
  #allocation0 [shape = 'u32[]', space=smem, size = 0x4, offset = 0x4, fixed_abs, tag = 'smem constant byte address 0x4 - core index']
  #allocation1 [shape = 'u32[144,128]{1,0:T(1,128)}', space=vmem, size = 0x12000, scoped, tag = 'internal scratch']
  %s0 = inlined_call_operand.hbm [shape: bf16[512,128], index: 0, kind: input, shape index: {}]
  %s1 = inlined_call_operand.hbm [shape: bf16[128,128], index: 1, kind: input, shape index: {}]
  %s2 = inlined_call_operand.hbm [shape: bf16[512,128], index: 2, kind: output, shape index: {0}]
  %s3 = inlined_call_operand.hbm [shape: f32[2,8,128], index: 3, kind: output, shape index: {1}]
  %s4 = inlined_call_operand.hbm [shape: f32[2,8,128], index: 4, kind: output, shape index: {2}]
  %5 = xla_tuple %s2, %s3, %s4
  %s6 = sld [smem:[#allocation0]]
  $region69: #{tpu_custom_call.1} parent=0
    _
  %s8 = ssub.s32 1, %s6
  %s9 = scalar_select 0, %s8, %s6
  $region1: #{tpu_custom_call.1} parent=0
    #allocation2 [shape = 'u8[65536]{0}', space=vmem, size = 0x10000, scoped, tag = 'input window, operand 0']
    #allocation3 [shape = 's32[2]{0}', space=sflag, size = 0x8, scoped, tag = 'scoped memory for tpu_custom_call.1']
    #allocation4 [shape = 's32[2]{0}', space=sflag, size = 0x8, scoped, tag = 'scoped memory for tpu_custom_call.1']
    #allocation5 [shape = 'u8[32768]{0}', space=vmem, size = 0x8000, scoped, tag = 'input window, operand 1, single buffered']
    #allocation6 [shape = 's32[1]{0}', space=sflag, size = 0x4, scoped, tag = 'scoped memory for tpu_custom_call.1']
    #allocation7 [shape = 'u8[65536]{0}', space=vmem, size = 0x10000, scoped, tag = 'output window, operand 0']
    #allocation8 [shape = 'u8[8192]{0}', space=vmem, size = 0x2000, scoped, tag = 'output window, operand 1']
    #allocation9 [shape = 's32[2]{0}', space=sflag, size = 0x8, scoped, tag = 'scoped memory for tpu_custom_call.1']
    #allocation10 [shape = 'u8[8192]{0}', space=vmem, size = 0x2000, scoped, tag = 'output window, operand 2']
    %10 = vsyncpa [#allocation3], 0
    %s11 = scalar_lea.sflag [#allocation3], 1
    %12 = vsyncpa %s11, 0
    %13 = vsyncpa [#allocation6], 0
    %14 = vsyncpa [#allocation4], 0
    %s15 = scalar_lea.sflag [#allocation4], 1
    %16 = vsyncpa %s15, 0
    %17 = vsyncpa [#allocation9], 0
    %s18 = scalar_lea.sflag [#allocation9], 1
    %19 = vsyncpa %s18, 0
    loop: start=0, step=1, limit=6
    $region2: #{tpu_custom_call.1} parent=1 // loop_pre_header
      _
    $region3: #{tpu_custom_call.1} parent=1 // loop_header
      %s21 = sphi 0, %s25
      %p22 = scmp.ge.s32.totalorder %s21, 6
      %s28 = sphi 0, %s40
      %s29 = sphi 0, %s36
      %s30 = sphi 0, %s28
      %s31 = sphi 0, %s29
      %s32 = sphi 0, %s30
      %s33 = sphi 0, %s31
      %s47 = sphi 0, %s49
      %s50 = sphi 0, %s47
      %s51 = sphi 0, %s50
      %s67 = sphi 0, %s51
      %s71 = sphi 0, %s71
      %s73 = sphi 0, %s71
      %s74 = sphi 0, %s73
      %s88 = sphi 0, %s74
      %s98 = sphi 0, %s100
      %s101 = sphi 0, %s98
      %s102 = sphi 0, %s101
      %s118 = sphi 0, %s102
      %s124 = sphi 0, %s126
      %s127 = sphi 0, %s124
      %s128 = sphi 0, %s127
      %s144 = sphi 0, %s128
      %s150 = sphi 0, %s152
      %s153 = sphi 0, %s150
      %s154 = sphi 0, %s153
      %s170 = sphi 0, %s154
    $region4: #{tpu_custom_call.1} parent=1 // loop_header_branch
      %24 = sbr.rel (%p22) target = $region8
    $region5: #{tpu_custom_call.1} parent=1 // loop_body
      %s26 = ssub.s32 %s21, 1
      %s27 = ssub.s32 %s21, 2
      %s34 = sadd.s32 1, %s29
      %p35 = scmp.ge.s32.totalorder %s34, 2
      %s36 = scalar_select %p35, 0, %s34
      %s37 = sadd.s32 1, %s28
      %s38 = scalar_select %p35, %s37, %s28
      %p39 = scmp.ge.s32.totalorder %s38, 2
      %s40 = scalar_select %p39, 0, %s38
      %s41 = smul.u32 %s28, 2
      %s42 = sadd.s32 %s41, %s29
      %s43 = smul.u32 %s40, 2
      %s44 = sadd.s32 %s43, %s36
      %s45 = ssub.s32 %s42, %s44
      %p46 = scmp.eq.s32.totalorder %s45, 0
      %s48 = sadd.s32 %s47, 1
      %s49 = scalar_select %p46, %s47, %s48
      %p52 = pneg %p46
      %p53 = scmp.eq.s32.totalorder %s21, 3
      %p54 = por %p52, %p53
      %p55 = scmp.ne.s32.totalorder %s47, %s50
      %p56 = scmp.eq.s32.totalorder %s21, 0
      %p57 = por %p55, %p56
      %p58 = scmp.ne.s32.totalorder %s47, %s50
      %p59 = scmp.eq.s32.totalorder %s26, 3
      %p60 = por %p58, %p59
      %p61 = scmp.ne.s32.totalorder %s50, %s51
      %p62 = scmp.eq.s32.totalorder %s26, 0
      %p63 = por %p61, %p62
      %p64 = scmp.ne.s32.totalorder %s50, %s51
      %p65 = scmp.eq.s32.totalorder %s27, 3
      %p66 = por %p64, %p65
      %p68 = scmp.ne.s32.totalorder %s51, %s67
      %p69 = scmp.eq.s32.totalorder %s27, 0
      %p70 = por %p68, %p69
      %s72 = sadd.s32 %s71, 1
      %p75 = scmp.eq.s32.totalorder %s21, 3
      %p76 = scmp.ne.s32.totalorder %s71, %s73
      %p77 = scmp.eq.s32.totalorder %s21, 0
      %p78 = por %p76, %p77
      %p79 = scmp.ne.s32.totalorder %s71, %s73
      %p80 = scmp.eq.s32.totalorder %s26, 3
      %p81 = por %p79, %p80
      %p82 = scmp.ne.s32.totalorder %s73, %s74
      %p83 = scmp.eq.s32.totalorder %s26, 0
      %p84 = por %p82, %p83
      %p85 = scmp.ne.s32.totalorder %s73, %s74
      %p86 = scmp.eq.s32.totalorder %s27, 3
      %p87 = por %p85, %p86
      %p89 = scmp.ne.s32.totalorder %s74, %s88
      %p90 = scmp.eq.s32.totalorder %s27, 0
      %p91 = por %p89, %p90
      %s92 = smul.u32 %s28, 2
      %s93 = sadd.s32 %s92, %s29
      %s94 = smul.u32 %s40, 2
      %s95 = sadd.s32 %s94, %s36
      %s96 = ssub.s32 %s93, %s95
      %p97 = scmp.eq.s32.totalorder %s96, 0
      %s99 = sadd.s32 %s98, 1
      %s100 = scalar_select %p97, %s98, %s99
      %p103 = pneg %p97
      %p104 = scmp.eq.s32.totalorder %s21, 3
      %p105 = por %p103, %p104
      %p106 = scmp.ne.s32.totalorder %s98, %s101
      %p107 = scmp.eq.s32.totalorder %s21, 0
      %p108 = por %p106, %p107
      %p109 = scmp.ne.s32.totalorder %s98, %s101
      %p110 = scmp.eq.s32.totalorder %s26, 3
      %p111 = por %p109, %p110
      %p112 = scmp.ne.s32.totalorder %s101, %s102
      %p113 = scmp.eq.s32.totalorder %s26, 0
      %p114 = por %p112, %p113
      %p115 = scmp.ne.s32.totalorder %s101, %s102
      %p116 = scmp.eq.s32.totalorder %s27, 3
      %p117 = por %p115, %p116
      %p119 = scmp.ne.s32.totalorder %s102, %s118
      %p120 = scmp.eq.s32.totalorder %s27, 0
      %p121 = por %p119, %p120
      %s122 = ssub.s32 %s28, %s40
      %p123 = scmp.eq.s32.totalorder %s122, 0
      %s125 = sadd.s32 %s124, 1
      %s126 = scalar_select %p123, %s124, %s125
      %p129 = pneg %p123
      %p130 = scmp.eq.s32.totalorder %s21, 3
      %p131 = por %p129, %p130
      %p132 = scmp.ne.s32.totalorder %s124, %s127
      %p133 = scmp.eq.s32.totalorder %s21, 0
      %p134 = por %p132, %p133
      %p135 = scmp.ne.s32.totalorder %s124, %s127
      %p136 = scmp.eq.s32.totalorder %s26, 3
      %p137 = por %p135, %p136
      %p138 = scmp.ne.s32.totalorder %s127, %s128
      %p139 = scmp.eq.s32.totalorder %s26, 0
      %p140 = por %p138, %p139
      %p141 = scmp.ne.s32.totalorder %s127, %s128
      %p142 = scmp.eq.s32.totalorder %s27, 3
      %p143 = por %p141, %p142
      %p145 = scmp.ne.s32.totalorder %s128, %s144
      %p146 = scmp.eq.s32.totalorder %s27, 0
      %p147 = por %p145, %p146
      %s148 = ssub.s32 %s28, %s40
      %p149 = scmp.eq.s32.totalorder %s148, 0
      %s151 = sadd.s32 %s150, 1
      %s152 = scalar_select %p149, %s150, %s151
      %p155 = pneg %p149
      %p156 = scmp.eq.s32.totalorder %s21, 3
      %p157 = por %p155, %p156
      %p158 = scmp.ne.s32.totalorder %s150, %s153
      %p159 = scmp.eq.s32.totalorder %s21, 0
      %p160 = por %p158, %p159
      %p161 = scmp.ne.s32.totalorder %s150, %s153
      %p162 = scmp.eq.s32.totalorder %s26, 3
      %p163 = por %p161, %p162
      %p164 = scmp.ne.s32.totalorder %s153, %s154
      %p165 = scmp.eq.s32.totalorder %s26, 0
      %p166 = por %p164, %p165
      %p167 = scmp.ne.s32.totalorder %s153, %s154
      %p168 = scmp.eq.s32.totalorder %s27, 3
      %p169 = por %p167, %p168
      %p171 = scmp.ne.s32.totalorder %s154, %s170
      %p172 = scmp.eq.s32.totalorder %s27, 0
      %p173 = por %p171, %p172
      %p174 = scmp.le.s32.totalorder 1, %s21
      %p175 = scmp.lt.s32.totalorder %s21, 5
      %p176 = pnand %p174, %p175
      %p177 = pneg %p176
      // Predicated region
      $region9: #{tpu_custom_call.1} parent=5 // pred_check
        _
      $region10: #{tpu_custom_call.1} parent=5 // pred_check_branch
        %179 = sbr.rel (%p176) target = $region12
      $region11: #{tpu_custom_call.1} parent=5 // pred_region
        %s180 = ssub.s32 %s21, 1
        // Predicated region
        $region13: #{tpu_custom_call.1} parent=11 // pred_check
          %p181 = pneg %p84
        $region14: #{tpu_custom_call.1} parent=11 // pred_check_branch
          %183 = sbr.rel (%p181) target = $region16
        $region15: #{tpu_custom_call.1} parent=11 // pred_region
          %s185 = ssub.s32 1024, 1024
          %186 = vsyncadd [#allocation6], %s185
          %s187 = sshll.u32 [#allocation5], 4
          %s188 = int_to_ptr.vmem [resolvable:$true] %s187
          %193 = dma.hbm_to_vmem [thread:$0]  %s1, 1024, %s188, [#allocation6], 64, 64, 4
        $region16: #{tpu_custom_call.1} parent=11 // pred_fallthru
          _
      $region12: #{tpu_custom_call.1} parent=5 // pred_fallthru
        _
      %p194 = scmp.lt.s32.totalorder %s21, 4
      // Predicated region
      $region17: #{tpu_custom_call.1} parent=5 // pred_check
        %p195 = pneg %p194
      $region18: #{tpu_custom_call.1} parent=5 // pred_check_branch
        %197 = sbr.rel (%p195) target = $region20
      $region19: #{tpu_custom_call.1} parent=5 // pred_region
        // Predicated region
        $region21: #{tpu_custom_call.1} parent=19 // pred_check
          %p198 = pneg %p57
        $region22: #{tpu_custom_call.1} parent=19 // pred_check_branch
          %200 = sbr.rel (%p198) target = $region24
        $region23: #{tpu_custom_call.1} parent=19 // pred_region
          %s201 = sand.u32 %s47, 1
          %s202 = scalar_lea.sflag [#allocation3], %s201
          %s203 = sand.u32 %s47, 1
          %s204 = smul.addr %s203, 64
          %s205 = scalar_lea.vmem [#allocation2], %s204
          %s206 = smul.u32 %s28, 2
          %s207 = sadd.s32 %s206, %s29
          %s208 = smul.u32 16, %s207
          %s210 = ssub.s32 1024, 1024
          %211 = vsyncadd %s202, %s210
          %s212 = smul.addr %s208, 64
          %s213 = scalar_lea.hbm %s0, %s212
          %s214 = sshll.u32 %s205, 4
          %s215 = int_to_ptr.vmem [resolvable:$true] %s214
          %220 = dma.hbm_to_vmem [thread:$0]  %s213, 1024, %s215, %s202, 64, 64, 4
        $region24: #{tpu_custom_call.1} parent=19 // pred_fallthru
          _
      $region20: #{tpu_custom_call.1} parent=5 // pred_fallthru
        _
      %p221 = scmp.le.s32.totalorder 1, %s21
      %p222 = scmp.lt.s32.totalorder %s21, 5
      %p223 = pnand %p221, %p222
      %p224 = pneg %p223
      // Predicated region
      $region25: #{tpu_custom_call.1} parent=5 // pred_check
        _
      $region26: #{tpu_custom_call.1} parent=5 // pred_check_branch
        %226 = sbr.rel (%p223) target = $region28
      $region27: #{tpu_custom_call.1} parent=5 // pred_region
        %s227 = ssub.s32 %s21, 1
        %s228 = sand.u32 %s50, 1
        %s229 = scalar_lea.sflag [#allocation3], %s228
        %s230 = sand.u32 %s50, 1
        %s231 = smul.addr %s230, 64
        %s232 = scalar_lea.vmem [#allocation2], %s231
        // Predicated region
        $region29: #{tpu_custom_call.1} parent=27 // pred_check
          %p233 = pneg %p63
        $region30: #{tpu_custom_call.1} parent=27 // pred_check_branch
          %235 = sbr.rel (%p233) target = $region32
        $region31: #{tpu_custom_call.1} parent=27 // pred_region
          %236 = dma.done %s229, 1024
        $region32: #{tpu_custom_call.1} parent=27 // pred_fallthru
          _
        // Predicated region
        $region33: #{tpu_custom_call.1} parent=27 // pred_check
          %p237 = pneg %p84
        $region34: #{tpu_custom_call.1} parent=27 // pred_check_branch
          %239 = sbr.rel (%p237) target = $region36
        $region35: #{tpu_custom_call.1} parent=27 // pred_region
          %240 = dma.done [#allocation6], 1024
        $region36: #{tpu_custom_call.1} parent=27 // pred_fallthru
          _
        %s241 = sand.u32 %s50, 1
        %s242 = scalar_lea.sflag [#allocation3], %s241
        %s243 = sand.u32 %s50, 1
        %s244 = smul.addr %s243, 64
        %s245 = scalar_lea.vmem [#allocation2], %s244
        %p246 = pneg %p63
        %p247 = pneg %p60
        %p248 = pneg %p84
        %p249 = pneg %p81
        %p250 = pneg %p114
        %p251 = pneg %p111
        %s252 = sand.u32 %s101, 1
        %s253 = scalar_lea.sflag [#allocation4], %s252
        %s254 = sand.u32 %s101, 1
        %s255 = smul.addr %s254, 64
        %s256 = scalar_lea.vmem [#allocation7], %s255
        %p257 = pneg %p140
        %p258 = pneg %p137
        %s259 = sand.u32 %s26, 1
        %s260 = scalar_lea.sflag [#allocation9], %s259
        %s261 = sand.u32 %s127, 1
        %s262 = smul.addr %s261, 8
        %s263 = scalar_lea.vmem [#allocation8], %s262
        %p264 = pneg %p166
        %p265 = pneg %p163
        %s266 = sand.u32 %s26, 1
        %s267 = scalar_lea.sflag [#allocation9], %s266
        %s268 = sand.u32 %s153, 1
        %s269 = smul.addr %s268, 8
        %s270 = scalar_lea.vmem [#allocation10], %s269
        %s271 = smul.u32 %s30, 2
        %s272 = sadd.s32 %s271, %s31
        %s273 = smul.u32 16, %s272
        %s274 = smul.u32 %s30, 2
        %s275 = sadd.s32 %s274, %s31
        %s276 = smul.u32 16, %s275
        %v278 = vld [vmem:[%s232] sm:$0xf]
        %v279 = vld [vmem:[%s232 + $0x4] sm:$0xf]
        %v280 = vld [vmem:[%s232 + $0x8] sm:$0xf]
        %v281 = vld [vmem:[%s232 + $0xc] sm:$0xf]
        %v282 = vld [vmem:[%s232 + $0x10] sm:$0xf]
        %v283 = vld [vmem:[%s232 + $0x14] sm:$0xf]
        %v284 = vld [vmem:[%s232 + $0x18] sm:$0xf]
        %v285 = vld [vmem:[%s232 + $0x1c] sm:$0xf]
        %v286 = vld [vmem:[%s232 + $0x20] sm:$0xf]
        %v287 = vld [vmem:[%s232 + $0x24] sm:$0xf]
        %v288 = vld [vmem:[%s232 + $0x28] sm:$0xf]
        %v289 = vld [vmem:[%s232 + $0x2c] sm:$0xf]
        %v290 = vld [vmem:[%s232 + $0x30] sm:$0xf]
        %v291 = vld [vmem:[%s232 + $0x34] sm:$0xf]
        %v292 = vld [vmem:[%s232 + $0x38] sm:$0xf]
        %v293 = vld [vmem:[%s232 + $0x3c] sm:$0xf]
        %v294 = vld [vmem:[#allocation5] sm:$0xf]
        %v295 = vld [vmem:[#allocation5 + $0x4] sm:$0xf]
        %v296 = vld [vmem:[#allocation5 + $0x8] sm:$0xf]
        %v297 = vld [vmem:[#allocation5 + $0xc] sm:$0xf]
        %v298 = vld [vmem:[#allocation5 + $0x10] sm:$0xf]
        %v299 = vld [vmem:[#allocation5 + $0x14] sm:$0xf]
        %v300 = vld [vmem:[#allocation5 + $0x18] sm:$0xf]
        %v301 = vld [vmem:[#allocation5 + $0x1c] sm:$0xf]
        %v302 = vld [vmem:[#allocation5 + $0x20] sm:$0xf]
        %v303 = vld [vmem:[#allocation5 + $0x24] sm:$0xf]
        %v304 = vld [vmem:[#allocation5 + $0x28] sm:$0xf]
        %v305 = vld [vmem:[#allocation5 + $0x2c] sm:$0xf]
        %v306 = vld [vmem:[#allocation5 + $0x30] sm:$0xf]
        %v307 = vld [vmem:[#allocation5 + $0x34] sm:$0xf]
        %v308 = vld [vmem:[#allocation5 + $0x38] sm:$0xf]
        %v309 = vld [vmem:[#allocation5 + $0x3c] sm:$0xf]
        %v326 = vunpack.c.l.b16 %v278
        %v327 = vunpack.c.l.b16 %v279
        %v328 = vunpack.c.l.b16 %v280
        %v329 = vunpack.c.l.b16 %v281
        %v330 = vunpack.c.l.b16 %v282
        %v331 = vunpack.c.l.b16 %v283
        %v332 = vunpack.c.l.b16 %v284
        %v333 = vunpack.c.l.b16 %v285
        %v334 = vunpack.c.l.b16 %v286
        %v335 = vunpack.c.l.b16 %v287
        %v336 = vunpack.c.l.b16 %v288
        %v337 = vunpack.c.l.b16 %v289
        %v338 = vunpack.c.l.b16 %v290
        %v339 = vunpack.c.l.b16 %v291
        %v340 = vunpack.c.l.b16 %v292
        %v341 = vunpack.c.l.b16 %v293
        %v342 = vpack.c.b16 %v327, %v326
        %v343 = vpack.c.b16 %v329, %v328
        %v344 = vpack.c.b16 %v331, %v330
        %v345 = vpack.c.b16 %v333, %v332
        %v346 = vpack.c.b16 %v335, %v334
        %v347 = vpack.c.b16 %v337, %v336
        %v348 = vpack.c.b16 %v339, %v338
        %v349 = vpack.c.b16 %v341, %v340
        %v374 = vunpack.c.l.b16 %v294
        %v375 = vunpack.c.l.b16 %v295
        %v376 = vunpack.c.l.b16 %v296
        %v377 = vunpack.c.l.b16 %v297
        %v378 = vunpack.c.l.b16 %v298
        %v379 = vunpack.c.l.b16 %v299
        %v380 = vunpack.c.l.b16 %v300
        %v381 = vunpack.c.l.b16 %v301
        %v382 = vunpack.c.l.b16 %v302
        %v383 = vunpack.c.l.b16 %v303
        %v384 = vunpack.c.l.b16 %v304
        %v385 = vunpack.c.l.b16 %v305
        %v386 = vunpack.c.l.b16 %v306
        %v387 = vunpack.c.l.b16 %v307
        %v388 = vunpack.c.l.b16 %v308
        %v389 = vunpack.c.l.b16 %v309
        %v390 = vpack.c.b16 %v375, %v374
        %v391 = vpack.c.b16 %v377, %v376
        %v392 = vpack.c.b16 %v379, %v378
        %v393 = vpack.c.b16 %v381, %v380
        %v394 = vpack.c.b16 %v383, %v382
        %v395 = vpack.c.b16 %v385, %v384
        %v396 = vpack.c.b16 %v387, %v386
        %v397 = vpack.c.b16 %v389, %v388
        %406 = vmatprep.subr.bf16.mxu0 0
        %407 = vmatpush1.bf16.msra.mxu0 %v390
        %408 = vmatprep.subr.bf16.mxu0 0
        %409 = vmatpush1.bf16.msra.mxu0 %v391
        %410 = vmatprep.subr.bf16.mxu0 0
        %411 = vmatpush1.bf16.msra.mxu0 %v392
        %412 = vmatprep.subr.bf16.mxu0 0
        %413 = vmatpush1.bf16.msra.mxu0 %v393
        %414 = vmatprep.subr.bf16.mxu0 0
        %415 = vmatpush1.bf16.msra.mxu0 %v394
        %416 = vmatprep.subr.bf16.mxu0 0
        %417 = vmatpush1.bf16.msra.mxu0 %v395
        %418 = vmatprep.subr.bf16.mxu0 0
        %419 = vmatpush1.bf16.msra.mxu0 %v396
        %420 = vmatprep.subr.bf16.mxu0 0
        %421 = vmatpush1.bf16.msra.mxu0 %v397
        %422 = vmatprep.subr.bf16.mxu0 0
        %423 = vmatpush1.bf16.msra.mxu0 0
        %424 = vmatprep.subr.bf16.mxu0 0
        %425 = vmatpush1.bf16.msra.mxu0 0
        %426 = vmatprep.subr.bf16.mxu0 0
        %427 = vmatpush1.bf16.msra.mxu0 0
        %428 = vmatprep.subr.bf16.mxu0 0
        %429 = vmatpush1.bf16.msra.mxu0 0
        %430 = vmatprep.subr.bf16.mxu0 0
        %431 = vmatpush1.bf16.msra.mxu0 0
        %432 = vmatprep.subr.bf16.mxu0 0
        %433 = vmatpush1.bf16.msra.mxu0 0
        %434 = vmatprep.subr.bf16.mxu0 0
        %435 = vmatpush1.bf16.msra.mxu0 0
        %436 = vmatprep.subr.bf16.mxu0 0
        %437 = vmatpush1.bf16.msra.mxu0 0
        %438 = vmatprep.mubr.bf16.mxu0 0
        %439 = vmatmul.mubr.bf16.gmra.mrb[0].mxu0 %v342
        %v440 = vpop.f32.mrb[0].mxu0
        %v441 = vadd.f32 0.0, %v440
        %v442 = vpop.f32.mrb[0].mxu0
        %v443 = vpop.f32.mrb[0].mxu0
        %v444 = vadd.f32 0.0, %v443
        %v445 = vpop.f32.mrb[0].mxu0
        %446 = vmatprep.mubr.bf16.mxu0 0
        %447 = vmatmul.mubr.bf16.gmra.mrb[0].mxu0 %v343
        %v448 = vpop.f32.mrb[0].mxu0
        %v449 = vadd.f32 0.0, %v448
        %v450 = vpop.f32.mrb[0].mxu0
        %v451 = vpop.f32.mrb[0].mxu0
        %v452 = vadd.f32 0.0, %v451
        %v453 = vpop.f32.mrb[0].mxu0
        %454 = vmatprep.mubr.bf16.mxu0 0
        %455 = vmatmul.mubr.bf16.gmra.mrb[0].mxu0 %v344
        %v456 = vpop.f32.mrb[0].mxu0
        %v457 = vadd.f32 0.0, %v456
        %v458 = vpop.f32.mrb[0].mxu0
        %v459 = vpop.f32.mrb[0].mxu0
        %v460 = vadd.f32 0.0, %v459
        %v461 = vpop.f32.mrb[0].mxu0
        %462 = vmatprep.mubr.bf16.mxu0 0
        %463 = vmatmul.mubr.bf16.gmra.mrb[0].mxu0 %v345
        %v464 = vpop.f32.mrb[0].mxu0
        %v465 = vadd.f32 0.0, %v464
        %v466 = vpop.f32.mrb[0].mxu0
        %v467 = vpop.f32.mrb[0].mxu0
        %v468 = vadd.f32 0.0, %v467
        %v469 = vpop.f32.mrb[0].mxu0
        %470 = vmatprep.mubr.bf16.mxu0 0
        %471 = vmatmul.mubr.bf16.gmra.mrb[0].mxu0 %v346
        %v472 = vpop.f32.mrb[0].mxu0
        %v473 = vadd.f32 0.0, %v472
        %v474 = vpop.f32.mrb[0].mxu0
        %v475 = vpop.f32.mrb[0].mxu0
        %v476 = vadd.f32 0.0, %v475
        %v477 = vpop.f32.mrb[0].mxu0
        %478 = vmatprep.mubr.bf16.mxu0 0
        %479 = vmatmul.mubr.bf16.gmra.mrb[0].mxu0 %v347
        %v480 = vpop.f32.mrb[0].mxu0
        %v481 = vadd.f32 0.0, %v480
        %v482 = vpop.f32.mrb[0].mxu0
        %v483 = vpop.f32.mrb[0].mxu0
        %v484 = vadd.f32 0.0, %v483
        %v485 = vpop.f32.mrb[0].mxu0
        %486 = vmatprep.mubr.bf16.mxu0 0
        %487 = vmatmul.mubr.bf16.gmra.mrb[0].mxu0 %v348
        %v488 = vpop.f32.mrb[0].mxu0
        %v489 = vadd.f32 0.0, %v488
        %v490 = vpop.f32.mrb[0].mxu0
        %v491 = vpop.f32.mrb[0].mxu0
        %v492 = vadd.f32 0.0, %v491
        %v493 = vpop.f32.mrb[0].mxu0
        %494 = vmatprep.mubr.bf16.mxu0 0
        %495 = vmatmul.mubr.bf16.gmra.mrb[0].mxu0 %v349
        %v496 = vpop.f32.mrb[0].mxu0
        %v497 = vadd.f32 0.0, %v496
        %v498 = vpop.f32.mrb[0].mxu0
        %v499 = vpop.f32.mrb[0].mxu0
        %v500 = vadd.f32 0.0, %v499
        %v501 = vpop.f32.mrb[0].mxu0
        %502 = vdwg.mxu0
        %v503 = vpack.c.bf16 %v444, %v441
        %v504 = vpack.c.bf16 %v452, %v449
        %v505 = vpack.c.bf16 %v460, %v457
        %v506 = vpack.c.bf16 %v468, %v465
        %v507 = vpack.c.bf16 %v476, %v473
        %v508 = vpack.c.bf16 %v484, %v481
        %v509 = vpack.c.bf16 %v492, %v489
        %v510 = vpack.c.bf16 %v500, %v497
        %v519 = vunpack.c.l.b16 %v503
        %v520 = vunpack.c.h.b16 %v503
        %v521 = vunpack.c.l.b16 %v504
        %v522 = vunpack.c.h.b16 %v504
        %v523 = vunpack.c.l.b16 %v505
        %v524 = vunpack.c.h.b16 %v505
        %v525 = vunpack.c.l.b16 %v506
        %v526 = vunpack.c.h.b16 %v506
        %v527 = vunpack.c.l.b16 %v507
        %v528 = vunpack.c.h.b16 %v507
        %v529 = vunpack.c.l.b16 %v508
        %v530 = vunpack.c.h.b16 %v508
        %v531 = vunpack.c.l.b16 %v509
        %v532 = vunpack.c.h.b16 %v509
        %v533 = vunpack.c.l.b16 %v510
        %v534 = vunpack.c.h.b16 %v510
        %v535 = vpack.c.b16 %v519, %v519
        %v536 = vpack.c.b16 %v520, %v520
        %v537 = vpack.c.b16 %v521, %v521
        %v538 = vpack.c.b16 %v522, %v522
        %v539 = vpack.c.b16 %v523, %v523
        %v540 = vpack.c.b16 %v524, %v524
        %v541 = vpack.c.b16 %v525, %v525
        %v542 = vpack.c.b16 %v526, %v526
        %v543 = vpack.c.b16 %v527, %v527
        %v544 = vpack.c.b16 %v528, %v528
        %v545 = vpack.c.b16 %v529, %v529
        %v546 = vpack.c.b16 %v530, %v530
        %v547 = vpack.c.b16 %v531, %v531
        %v548 = vpack.c.b16 %v532, %v532
        %v549 = vpack.c.b16 %v533, %v533
        %v550 = vpack.c.b16 %v534, %v534
        %567 = vst [vmem:[%s256] sm:$0xf] %v535
        %568 = vst [vmem:[%s256 + $0x4] sm:$0xf] %v536
        %569 = vst [vmem:[%s256 + $0x8] sm:$0xf] %v537
        %570 = vst [vmem:[%s256 + $0xc] sm:$0xf] %v538
        %571 = vst [vmem:[%s256 + $0x10] sm:$0xf] %v539
        %572 = vst [vmem:[%s256 + $0x14] sm:$0xf] %v540
        %573 = vst [vmem:[%s256 + $0x18] sm:$0xf] %v541
        %574 = vst [vmem:[%s256 + $0x1c] sm:$0xf] %v542
        %575 = vst [vmem:[%s256 + $0x20] sm:$0xf] %v543
        %576 = vst [vmem:[%s256 + $0x24] sm:$0xf] %v544
        %577 = vst [vmem:[%s256 + $0x28] sm:$0xf] %v545
        %578 = vst [vmem:[%s256 + $0x2c] sm:$0xf] %v546
        %579 = vst [vmem:[%s256 + $0x30] sm:$0xf] %v547
        %580 = vst [vmem:[%s256 + $0x34] sm:$0xf] %v548
        %581 = vst [vmem:[%s256 + $0x38] sm:$0xf] %v549
        %582 = vst [vmem:[%s256 + $0x3c] sm:$0xf] %v550
        %p583 = scmp.eq.s32.totalorder %s31, 0
        // Predicated region
        $region37: #{tpu_custom_call.1} parent=27 // pred_check
          %p584 = pneg %p583
        $region38: #{tpu_custom_call.1} parent=27 // pred_check_branch
          %586 = sbr.rel (%p584) target = $region40
        $region39: #{tpu_custom_call.1} parent=27 // pred_region
          %587 = vst [vmem:[%s263] sm:$0xff] 0.0
          %588 = vst [vmem:[%s270] sm:$0xff] 0.0
        $region40: #{tpu_custom_call.1} parent=27 // pred_fallthru
          _
        %v589 = vld [vmem:[%s263] sm:$0xff]
        %v590 = vadd.f32 %v441, %v444
        %v591 = vadd.f32 %v590, %v449
        %v592 = vadd.f32 %v591, %v452
        %v593 = vadd.f32 %v592, %v457
        %v594 = vadd.f32 %v593, %v460
        %v595 = vadd.f32 %v594, %v465
        %v596 = vadd.f32 %v595, %v468
        %v597 = vadd.f32 %v596, %v473
        %v598 = vadd.f32 %v597, %v476
        %v599 = vadd.f32 %v598, %v481
        %v600 = vadd.f32 %v599, %v484
        %v601 = vadd.f32 %v600, %v489
        %v602 = vadd.f32 %v601, %v492
        %v603 = vadd.f32 %v602, %v497
        %v604 = vadd.f32 %v603, %v500
        %v605 = vadd.f32 %v589, %v604
        %606 = vst [vmem:[%s263] sm:$0xff] %v605
        %v607 = vld [vmem:[%s270] sm:$0xff]
        %v608 = vmul.f32 %v441, %v441
        %v609 = vmul.f32 %v444, %v444
        %v610 = vmul.f32 %v449, %v449
        %v611 = vmul.f32 %v452, %v452
        %v612 = vmul.f32 %v457, %v457
        %v613 = vmul.f32 %v460, %v460
        %v614 = vmul.f32 %v465, %v465
        %v615 = vmul.f32 %v468, %v468
        %v616 = vmul.f32 %v473, %v473
        %v617 = vmul.f32 %v476, %v476
        %v618 = vmul.f32 %v481, %v481
        %v619 = vmul.f32 %v484, %v484
        %v620 = vmul.f32 %v489, %v489
        %v621 = vmul.f32 %v492, %v492
        %v622 = vmul.f32 %v497, %v497
        %v623 = vmul.f32 %v500, %v500
        %v624 = vadd.f32 %v608, %v609
        %v625 = vadd.f32 %v624, %v610
        %v626 = vadd.f32 %v625, %v611
        %v627 = vadd.f32 %v626, %v612
        %v628 = vadd.f32 %v627, %v613
        %v629 = vadd.f32 %v628, %v614
        %v630 = vadd.f32 %v629, %v615
        %v631 = vadd.f32 %v630, %v616
        %v632 = vadd.f32 %v631, %v617
        %v633 = vadd.f32 %v632, %v618
        %v634 = vadd.f32 %v633, %v619
        %v635 = vadd.f32 %v634, %v620
        %v636 = vadd.f32 %v635, %v621
        %v637 = vadd.f32 %v636, %v622
        %v638 = vadd.f32 %v637, %v623
        %v639 = vadd.f32 %v607, %v638
        %640 = vst [vmem:[%s270] sm:$0xff] %v639
        %s641 = sand.u32 %s101, 1
        %s642 = scalar_lea.sflag [#allocation4], %s641
        %s643 = sand.u32 %s101, 1
        %s644 = smul.addr %s643, 64
        %s645 = scalar_lea.vmem [#allocation7], %s644
        %s646 = sand.u32 %s26, 1
        %s647 = scalar_lea.sflag [#allocation9], %s646
        %s648 = sand.u32 %s127, 1
        %s649 = smul.addr %s648, 8
        %s650 = scalar_lea.vmem [#allocation8], %s649
        %s651 = sand.u32 %s26, 1
        %s652 = scalar_lea.sflag [#allocation9], %s651
        %s653 = sand.u32 %s153, 1
        %s654 = smul.addr %s653, 8
        %s655 = scalar_lea.vmem [#allocation10], %s654
        // Predicated region
        $region41: #{tpu_custom_call.1} parent=27 // pred_check
          %p656 = pneg %p111
        $region42: #{tpu_custom_call.1} parent=27 // pred_check_branch
          %658 = sbr.rel (%p656) target = $region44
        $region43: #{tpu_custom_call.1} parent=27 // pred_region
          %s659 = smul.u32 %s30, 2
          %s660 = sadd.s32 %s659, %s31
          %s661 = smul.u32 16, %s660
          %s663 = ssub.s32 1024, 1024
          %664 = vsyncadd %s642, %s663
          %s665 = smul.addr %s661, 64
          %s666 = scalar_lea.hbm %s2, %s665
          %s667 = sshll.u32 %s645, 4
          %s668 = int_to_ptr.vmem [resolvable:$true] %s667
          %673 = dma.vmem_to_hbm [thread:$0]  %s668, 1024, %s666, %s642, 64, 64, 4
        $region44: #{tpu_custom_call.1} parent=27 // pred_fallthru
          _
        // Predicated region
        $region45: #{tpu_custom_call.1} parent=27 // pred_check
          %p674 = pneg %p137
        $region46: #{tpu_custom_call.1} parent=27 // pred_check_branch
          %676 = sbr.rel (%p674) target = $region48
        $region47: #{tpu_custom_call.1} parent=27 // pred_region
          %s678 = ssub.s32 128, 128
          %679 = vsyncadd %s647, %s678
          %s680 = smul.addr %s30, 128
          %s681 = scalar_lea.hbm %s3, %s680
          %s683 = sshll.u32 %s650, 4
          %s684 = int_to_ptr.vmem [resolvable:$true] %s683
          %686 = dma.vmem_to_hbm [thread:$0]  %s684, 128, %s681, %s647
        $region48: #{tpu_custom_call.1} parent=27 // pred_fallthru
          _
        // Predicated region
        $region49: #{tpu_custom_call.1} parent=27 // pred_check
          %p687 = pneg %p163
        $region50: #{tpu_custom_call.1} parent=27 // pred_check_branch
          %689 = sbr.rel (%p687) target = $region52
        $region51: #{tpu_custom_call.1} parent=27 // pred_region
          %s691 = ssub.s32 128, 128
          %692 = vsyncadd %s652, %s691
          %s693 = smul.addr %s30, 128
          %s694 = scalar_lea.hbm %s4, %s693
          %s696 = sshll.u32 %s655, 4
          %s697 = int_to_ptr.vmem [resolvable:$true] %s696
          %699 = dma.vmem_to_hbm [thread:$0]  %s697, 128, %s694, %s652
        $region52: #{tpu_custom_call.1} parent=27 // pred_fallthru
          _
      $region28: #{tpu_custom_call.1} parent=5 // pred_fallthru
        _
      %p700 = scmp.le.s32.totalorder 2, %s21
      // Predicated region
      $region53: #{tpu_custom_call.1} parent=5 // pred_check
        %p701 = pneg %p700
      $region54: #{tpu_custom_call.1} parent=5 // pred_check_branch
        %703 = sbr.rel (%p701) target = $region56
      $region55: #{tpu_custom_call.1} parent=5 // pred_region
        %s704 = ssub.s32 %s21, 2
        // Predicated region
        $region57: #{tpu_custom_call.1} parent=55 // pred_check
          %p705 = pneg %p117
        $region58: #{tpu_custom_call.1} parent=55 // pred_check_branch
          %707 = sbr.rel (%p705) target = $region60
        $region59: #{tpu_custom_call.1} parent=55 // pred_region
          %s708 = sand.u32 %s102, 1
          %s709 = scalar_lea.sflag [#allocation4], %s708
          %s710 = sand.u32 %s102, 1
          %s711 = smul.addr %s710, 64
          %s712 = scalar_lea.vmem [#allocation7], %s711
          %713 = dma.done %s709, 1024
        $region60: #{tpu_custom_call.1} parent=55 // pred_fallthru
          _
        // Predicated region
        $region61: #{tpu_custom_call.1} parent=55 // pred_check
          %p714 = pneg %p143
        $region62: #{tpu_custom_call.1} parent=55 // pred_check_branch
          %716 = sbr.rel (%p714) target = $region64
        $region63: #{tpu_custom_call.1} parent=55 // pred_region
          %s717 = sand.u32 %s27, 1
          %s718 = scalar_lea.sflag [#allocation9], %s717
          %s719 = sand.u32 %s128, 1
          %s720 = smul.addr %s719, 8
          %s721 = scalar_lea.vmem [#allocation8], %s720
          %722 = dma.done %s718, 128
        $region64: #{tpu_custom_call.1} parent=55 // pred_fallthru
          _
        // Predicated region
        $region65: #{tpu_custom_call.1} parent=55 // pred_check
          %p723 = pneg %p169
        $region66: #{tpu_custom_call.1} parent=55 // pred_check_branch
          %725 = sbr.rel (%p723) target = $region68
        $region67: #{tpu_custom_call.1} parent=55 // pred_region
          %s726 = sand.u32 %s27, 1
          %s727 = scalar_lea.sflag [#allocation9], %s726
          %s728 = sand.u32 %s154, 1
          %s729 = smul.addr %s728, 8
          %s730 = scalar_lea.vmem [#allocation10], %s729
          %731 = dma.done %s727, 128
        $region68: #{tpu_custom_call.1} parent=55 // pred_fallthru
          _
      $region56: #{tpu_custom_call.1} parent=5 // pred_fallthru
        _
    $region6: #{tpu_custom_call.1} parent=1 // loop_footer
      %s25 = sadd.s32 1, %s21
    $region7: #{tpu_custom_call.1} parent=1 // loop_footer_branch
      %20 = sbr.rel target = $region3
    $region8: #{tpu_custom_call.1} parent=1 // loop_exit
      _
    %732 = vsyncpa [#allocation3], 1
    %s733 = scalar_lea.sflag [#allocation3], 1
    %734 = vsyncpa %s733, 1
    %735 = vsyncpa [#allocation6], 1
    %736 = vsyncpa [#allocation4], 1
    %s737 = scalar_lea.sflag [#allocation4], 1
    %738 = vsyncpa %s737, 1
    %739 = vsyncpa [#allocation9], 1
    %s740 = scalar_lea.sflag [#allocation9], 1
    %741 = vsyncpa %s740, 1

</llo_original>
